<compile_context>
chip_gen: v7x
topology: tpu7x:2x2x1
jax: 0.10.0
libtpu: 0.0.40
codegen_flags: <defaults>
</compile_context>

<pallas_src>
import functools

import jax
import jax.numpy as jnp
from jax.experimental import pallas as pl
from jax.experimental.pallas import tpu as pltpu


def _round_up(x, m):
    return (x + m - 1) // m * m


def _pick_batch_tile(b, target):
    """Batch tile: capped at `target`; if the whole batch would be one tile but
    is big enough to split, halve it so a v7x dual-TensorCore chip gets >= 2
    parallel grid steps."""
    tb = min(target, b)
    if tb == b and b >= 16:
        tb = (b + 1) // 2
    return max(tb, 1)


def gcn_kernel(a_ref, x_ref, w_ref, b_ref, o_ref, f_ref, *,
               supports_len, order, tb, cp, vp, c_out, k_terms):
    """One batch tile of TB (n, l) slabs.

    a_ref: (S, Vp, Vp)   bf16  stacked supports (right-multipliers), resident
    x_ref: (TB, Cp, Vp)  bf16  input tile: rows = (batch, channel), lanes = nodes
    w_ref: (c_out, K*Cp) bf16  Linear weight (PyTorch concat order), resident
    b_ref: (1, c_out, 1) f32   Linear bias, resident
    o_ref: (TB, c_out, Vp)     output tile
    f_ref: (TB, K*Cp, Vp) bf16 VMEM scratch holding all K diffusion terms
    """
    x3 = x_ref[...]                                    # (TB, Cp, Vp) bf16
    f_ref[:, 0:cp, :] = x3                             # identity term (k = 0)

    # Graph diffusion: each hop is one large 2-D MXU matmul, M = TB*Cp rows,
    # Vp-deep contraction. bf16 operands, f32 accumulation.
    x2d = x3.reshape(tb * cp, vp)                      # tile-preserving (Cp % 8 == 0)
    k = 1
    for s in range(supports_len):                      # static unroll, S small
        a_s = a_ref[s]                                 # (Vp, Vp) bf16
        xk = x2d
        for _ in range(order):                         # higher hops reuse the chain
            xk = jnp.dot(xk, a_s,
                         preferred_element_type=jnp.float32).astype(jnp.bfloat16)
            f_ref[:, k * cp:(k + 1) * cp, :] = xk.reshape(tb, cp, vp)
            k += 1

    # Fused mix: concat-of-terms @ W^T as ONE batched matmul with a K*Cp-deep
    # contraction (instead of K tiny 32-deep matmuls + K f32 accumulator
    # read-modify-write passes). W is broadcast once per tile, in bf16.
    w_b = jnp.broadcast_to(w_ref[...][None], (tb, c_out, k_terms * cp))
    acc = jnp.einsum('bof,bfv->bov', w_b, f_ref[...],
                     preferred_element_type=jnp.float32)
    # Bias added exactly once; implicit (1, c_out, 1) broadcast inside the add.
    o_ref[...] = (acc + b_ref[...]).astype(o_ref.dtype)
    # TODO(synk): dropout is the identity in eval mode; training-mode dropout omitted.


def gcn_forward(x, supports, w_pt, bias, *, order=2, max_batch_tile=64,
                vmem_limit_bytes=48 * 1024 * 1024):
    """x: (N, V, L, C); supports: list of (V, V); w_pt: (c_out, K*C); bias: (c_out,)."""
    N, V, L, C = x.shape
    S = len(supports)
    K = order * S + 1
    c_out = w_pt.shape[0]
    assert w_pt.shape[1] == K * C
    out_dtype = x.dtype

    B = N * L
    Cp = _round_up(C, 8)             # channel pad: sublane multiple
    Vp = _round_up(V, 128)           # node/lane pad: full vregs + full MXU fill
    TB = _pick_batch_tile(B, max_batch_tile)
    Bp = _round_up(B, TB)            # batch pad: keeps the tile size unconditionally
    grid_len = Bp // TB

    # ---- wrapper-side layout glue (plain JAX) ----
    # TODO(synk): these transposes are HBM round-trips; in the full Graph WaveNet
    # block keep the channel-major (B, C, V) layout end-to-end instead.
    xr = jnp.transpose(x, (0, 2, 3, 1)).reshape(B, C, V).astype(jnp.bfloat16)
    xr = jnp.pad(xr, ((0, Bp - B), (0, Cp - C), (0, Vp - V)))
    a = jnp.stack(supports, axis=0).astype(jnp.bfloat16)            # (S, V, V)
    a = jnp.pad(a, ((0, 0), (0, Vp - V), (0, Vp - V)))              # zero rows+cols
    # nn.Linear weight (c_out, K*C) -> (c_out, K*Cp); padded channels are zero.
    w = w_pt.reshape(c_out, K, C)
    w = jnp.pad(w, ((0, 0), (0, 0), (0, Cp - C)))
    w = w.reshape(c_out, K * Cp).astype(jnp.bfloat16)
    b3 = bias.reshape(1, c_out, 1).astype(jnp.float32)

    flops = 2 * Bp * Cp * Vp * Vp * (S * order) + 2 * Bp * (K * Cp) * c_out * Vp
    bytes_accessed = (Bp * Cp * Vp * 2                       # x (bf16)
                      + Bp * c_out * Vp * jnp.dtype(out_dtype).itemsize
                      + S * Vp * Vp * 2 + c_out * K * Cp * 2 + c_out * 4)

    kernel = functools.partial(gcn_kernel, supports_len=S, order=order,
                               tb=TB, cp=Cp, vp=Vp, c_out=c_out, k_terms=K)
    out_k = pl.pallas_call(
        kernel,
        out_shape=jax.ShapeDtypeStruct((Bp, c_out, Vp), out_dtype),
        grid=(grid_len,),
        in_specs=[
            pl.BlockSpec((S, Vp, Vp), lambda i: (0, 0, 0)),      # supports, resident
            pl.BlockSpec((TB, Cp, Vp), lambda i: (i, 0, 0)),     # TB batch slabs/step
            pl.BlockSpec((c_out, K * Cp), lambda i: (0, 0)),     # weight, resident
            pl.BlockSpec((1, c_out, 1), lambda i: (0, 0, 0)),    # bias, resident
        ],
        out_specs=pl.BlockSpec((TB, c_out, Vp), lambda i: (i, 0, 0)),
        scratch_shapes=[pltpu.VMEM((TB, K * Cp, Vp), jnp.bfloat16)],
        compiler_params=pltpu.CompilerParams(
            dimension_semantics=("parallel",),
            vmem_limit_bytes=vmem_limit_bytes),
        cost_estimate=pl.CostEstimate(flops=int(flops), transcendentals=0,
                                      bytes_accessed=int(bytes_accessed)),
    )(a, xr, w, b3)

    # Drop padded batch rows / padded node lanes, then restore PyTorch layout.
    out = out_k[:B, :, :V]
    return jnp.transpose(out.reshape(N, L, c_out, V), (0, 3, 1, 2))


def gcn_reference(x, supports, w_pt, bias, *, order=2):
    """Pure-JAX f32 reference mirroring the PyTorch forward."""
    out = [x]
    for a in supports:
        x1 = jnp.einsum('nvlc,vw->nwlc', x, a)
        out.append(x1)
        for _ in range(2, order + 1):
            x1 = jnp.einsum('nvlc,vw->nwlc', x1, a)
            out.append(x1)
    h = jnp.concatenate(out, axis=-1)
    return jnp.einsum('nvlf,of->nvlo', h, w_pt) + bias


def _run_case(key, N, V, L, C_IN, C_OUT, S, order, max_batch_tile):
    k_x, k_a, k_w, k_b = jax.random.split(key, 4)
    c_in_mlp = (order * S + 1) * C_IN
    x = jax.random.normal(k_x, (N, V, L, C_IN), jnp.float32)
    supports = [
        jax.random.uniform(jax.random.fold_in(k_a, i), (V, V), jnp.float32)
        for i in range(S)
    ]
    w_pt = jax.random.normal(k_w, (C_OUT, c_in_mlp), jnp.float32) / (c_in_mlp ** 0.5)
    bias = jax.random.normal(k_b, (C_OUT,), jnp.float32) * 0.01

    out = jax.block_until_ready(
        gcn_forward(x, supports, w_pt, bias, order=order,
                    max_batch_tile=max_batch_tile))
    ref = gcn_reference(x, supports, w_pt, bias, order=order)

    assert out.shape == (N, V, L, C_OUT), out.shape
    # bf16 MXU operands with f32 accumulation: check error vs the output scale.
    rel_err = float(jnp.max(jnp.abs(out - ref)) / (jnp.max(jnp.abs(ref)) + 1e-6))
    assert rel_err < 4e-2, f"relative error too large: {rel_err}"


if __name__ == "__main__":
    key = jax.random.PRNGKey(0)
    k0, k1 = jax.random.split(key)

    # Case 1: small shapes; channel + lane padding, 2-step "parallel" grid.
    _run_case(k0, N=2, V=8, L=8, C_IN=4, C_OUT=8, S=3, order=2,
              max_batch_tile=64)

    # Case 2: awkward sizes; forces batch padding (B=22 -> 24, 3 grid steps),
    # V=13 -> 128 lane padding and C=5 -> 8 channel padding.
    _run_case(k1, N=2, V=13, L=11, C_IN=5, C_OUT=16, S=2, order=2,
              max_batch_tile=8)

    print("KERNEL_OK")
</pallas_src>

<mosaic_0001>
module attributes {stable_mosaic.version = 11 : i64} {
  func.func @gcn_kernel(%arg0: i32, %arg1: memref<3x128x128xbf16, #tpu.memory_space<vmem>>, %arg2: memref<8x8x128xbf16, #tpu.memory_space<vmem>>, %arg3: memref<8x56xbf16, #tpu.memory_space<vmem>>, %arg4: memref<1x8x1xf32, #tpu.memory_space<vmem>>, %arg5: memref<8x8x128xf32, #tpu.memory_space<vmem>>, %arg6: memref<8x56x128xbf16, #tpu.memory_space<vmem>>) attributes {dimension_semantics = [#tpu.dimension_semantics<parallel>], iteration_bounds = array<i64: 2>, scalar_prefetch = 0 : i64, scratch_operands = 1 : i64, tpu.core_type = #tpu.core_type<tc>, window_params = [{pipeline_mode = #tpu.pipeline_mode<synchronous>, transform_indices = @transform_0, window_bounds = array<i64: 3, 128, 128>}, {transform_indices = @transform_1, window_bounds = array<i64: 8, 8, 128>}, {pipeline_mode = #tpu.pipeline_mode<synchronous>, transform_indices = @transform_2, window_bounds = array<i64: 8, 56>}, {pipeline_mode = #tpu.pipeline_mode<synchronous>, transform_indices = @transform_3, window_bounds = array<i64: 1, 8, 1>}, {transform_indices = @transform_4, window_bounds = array<i64: 8, 8, 128>}]} {
    %c0 = arith.constant 0 : index
    %c0_0 = arith.constant 0 : index
    %c0_1 = arith.constant 0 : index
    %0 = vector.load %arg2[%c0, %c0_0, %c0_1] : memref<8x8x128xbf16, #tpu.memory_space<vmem>>, vector<8x8x128xbf16>
    %c0_2 = arith.constant 0 : index
    %c0_3 = arith.constant 0 : index
    %c0_4 = arith.constant 0 : index
    %1 = vector.load %arg6[%c0_2, %c0_3, %c0_4] : memref<8x56x128xbf16, #tpu.memory_space<vmem>>, vector<8x8x128xbf16>
    tpu.vector_store %arg6[%c0_2, %c0_3, %c0_4], %0 {strides = array<i32>} : memref<8x56x128xbf16, #tpu.memory_space<vmem>>, vector<8x8x128xbf16>,
    %2 = vector.shape_cast %0 : vector<8x8x128xbf16> to vector<64x128xbf16>
    %c0_5 = arith.constant 0 : index
    %c0_6 = arith.constant 0 : index
    %c0_7 = arith.constant 0 : index
    %3 = vector.load %arg1[%c0_5, %c0_6, %c0_7] : memref<3x128x128xbf16, #tpu.memory_space<vmem>>, vector<1x128x128xbf16>
    %4 = vector.shape_cast %3 : vector<1x128x128xbf16> to vector<128x128xbf16>
    %cst = arith.constant dense<0.000000e+00> : vector<64x128xf32>
    %5 = tpu.matmul %2, %4, %cst {dimension_numbers = #tpu.dot_dimension_numbers<[1], [0], [0], [1], [0, 0, 1, 1], [], []>} : vector<64x128xbf16>, vector<128x128xbf16>, vector<64x128xf32> -> vector<64x128xf32>
    %6 = arith.truncf %5 : vector<64x128xf32> to vector<64x128xbf16>
    %7 = vector.shape_cast %6 : vector<64x128xbf16> to vector<8x8x128xbf16>
    %c0_8 = arith.constant 0 : index
    %c8 = arith.constant 8 : index
    %c0_9 = arith.constant 0 : index
    %8 = vector.load %arg6[%c0_8, %c8, %c0_9] : memref<8x56x128xbf16, #tpu.memory_space<vmem>>, vector<8x8x128xbf16>
    tpu.vector_store %arg6[%c0_8, %c8, %c0_9], %7 {strides = array<i32>} : memref<8x56x128xbf16, #tpu.memory_space<vmem>>, vector<8x8x128xbf16>,
    %cst_10 = arith.constant dense<0.000000e+00> : vector<64x128xf32>
    %9 = tpu.matmul %6, %4, %cst_10 {dimension_numbers = #tpu.dot_dimension_numbers<[1], [0], [0], [1], [0, 0, 1, 1], [], []>} : vector<64x128xbf16>, vector<128x128xbf16>, vector<64x128xf32> -> vector<64x128xf32>
    %10 = arith.truncf %9 : vector<64x128xf32> to vector<64x128xbf16>
    %11 = vector.shape_cast %10 : vector<64x128xbf16> to vector<8x8x128xbf16>
    %c0_11 = arith.constant 0 : index
    %c16 = arith.constant 16 : index
    %c0_12 = arith.constant 0 : index
    %12 = vector.load %arg6[%c0_11, %c16, %c0_12] : memref<8x56x128xbf16, #tpu.memory_space<vmem>>, vector<8x8x128xbf16>
    tpu.vector_store %arg6[%c0_11, %c16, %c0_12], %11 {strides = array<i32>} : memref<8x56x128xbf16, #tpu.memory_space<vmem>>, vector<8x8x128xbf16>,
    %c1 = arith.constant 1 : index
    %c0_13 = arith.constant 0 : index
    %c0_14 = arith.constant 0 : index
    %13 = vector.load %arg1[%c1, %c0_13, %c0_14] : memref<3x128x128xbf16, #tpu.memory_space<vmem>>, vector<1x128x128xbf16>
    %14 = vector.shape_cast %13 : vector<1x128x128xbf16> to vector<128x128xbf16>
    %cst_15 = arith.constant dense<0.000000e+00> : vector<64x128xf32>
    %15 = tpu.matmul %2, %14, %cst_15 {dimension_numbers = #tpu.dot_dimension_numbers<[1], [0], [0], [1], [0, 0, 1, 1], [], []>} : vector<64x128xbf16>, vector<128x128xbf16>, vector<64x128xf32> -> vector<64x128xf32>
    %16 = arith.truncf %15 : vector<64x128xf32> to vector<64x128xbf16>
    %17 = vector.shape_cast %16 : vector<64x128xbf16> to vector<8x8x128xbf16>
    %c0_16 = arith.constant 0 : index
    %c24 = arith.constant 24 : index
    %c0_17 = arith.constant 0 : index
    %18 = vector.load %arg6[%c0_16, %c24, %c0_17] : memref<8x56x128xbf16, #tpu.memory_space<vmem>>, vector<8x8x128xbf16>
    tpu.vector_store %arg6[%c0_16, %c24, %c0_17], %17 {strides = array<i32>} : memref<8x56x128xbf16, #tpu.memory_space<vmem>>, vector<8x8x128xbf16>,
    %cst_18 = arith.constant dense<0.000000e+00> : vector<64x128xf32>
    %19 = tpu.matmul %16, %14, %cst_18 {dimension_numbers = #tpu.dot_dimension_numbers<[1], [0], [0], [1], [0, 0, 1, 1], [], []>} : vector<64x128xbf16>, vector<128x128xbf16>, vector<64x128xf32> -> vector<64x128xf32>
    %20 = arith.truncf %19 : vector<64x128xf32> to vector<64x128xbf16>
    %21 = vector.shape_cast %20 : vector<64x128xbf16> to vector<8x8x128xbf16>
    %c0_19 = arith.constant 0 : index
    %c32 = arith.constant 32 : index
    %c0_20 = arith.constant 0 : index
    %22 = vector.load %arg6[%c0_19, %c32, %c0_20] : memref<8x56x128xbf16, #tpu.memory_space<vmem>>, vector<8x8x128xbf16>
    tpu.vector_store %arg6[%c0_19, %c32, %c0_20], %21 {strides = array<i32>} : memref<8x56x128xbf16, #tpu.memory_space<vmem>>, vector<8x8x128xbf16>,
    %c2 = arith.constant 2 : index
    %c0_21 = arith.constant 0 : index
    %c0_22 = arith.constant 0 : index
    %23 = vector.load %arg1[%c2, %c0_21, %c0_22] : memref<3x128x128xbf16, #tpu.memory_space<vmem>>, vector<1x128x128xbf16>
    %24 = vector.shape_cast %23 : vector<1x128x128xbf16> to vector<128x128xbf16>
    %cst_23 = arith.constant dense<0.000000e+00> : vector<64x128xf32>
    %25 = tpu.matmul %2, %24, %cst_23 {dimension_numbers = #tpu.dot_dimension_numbers<[1], [0], [0], [1], [0, 0, 1, 1], [], []>} : vector<64x128xbf16>, vector<128x128xbf16>, vector<64x128xf32> -> vector<64x128xf32>
    %26 = arith.truncf %25 : vector<64x128xf32> to vector<64x128xbf16>
    %27 = vector.shape_cast %26 : vector<64x128xbf16> to vector<8x8x128xbf16>
    %c0_24 = arith.constant 0 : index
    %c40 = arith.constant 40 : index
    %c0_25 = arith.constant 0 : index
    %28 = vector.load %arg6[%c0_24, %c40, %c0_25] : memref<8x56x128xbf16, #tpu.memory_space<vmem>>, vector<8x8x128xbf16>
    tpu.vector_store %arg6[%c0_24, %c40, %c0_25], %27 {strides = array<i32>} : memref<8x56x128xbf16, #tpu.memory_space<vmem>>, vector<8x8x128xbf16>,
    %cst_26 = arith.constant dense<0.000000e+00> : vector<64x128xf32>
    %29 = tpu.matmul %26, %24, %cst_26 {dimension_numbers = #tpu.dot_dimension_numbers<[1], [0], [0], [1], [0, 0, 1, 1], [], []>} : vector<64x128xbf16>, vector<128x128xbf16>, vector<64x128xf32> -> vector<64x128xf32>
    %30 = arith.truncf %29 : vector<64x128xf32> to vector<64x128xbf16>
    %31 = vector.shape_cast %30 : vector<64x128xbf16> to vector<8x8x128xbf16>
    %c0_27 = arith.constant 0 : index
    %c48 = arith.constant 48 : index
    %c0_28 = arith.constant 0 : index
    %32 = vector.load %arg6[%c0_27, %c48, %c0_28] : memref<8x56x128xbf16, #tpu.memory_space<vmem>>, vector<8x8x128xbf16>
    tpu.vector_store %arg6[%c0_27, %c48, %c0_28], %31 {strides = array<i32>} : memref<8x56x128xbf16, #tpu.memory_space<vmem>>, vector<8x8x128xbf16>,
    %c0_29 = arith.constant 0 : index
    %c0_30 = arith.constant 0 : index
    %33 = vector.load %arg3[%c0_29, %c0_30] : memref<8x56xbf16, #tpu.memory_space<vmem>>, vector<8x56xbf16>
    %34 = vector.shape_cast %33 : vector<8x56xbf16> to vector<1x8x56xbf16>
    %35 = vector.shape_cast %34 : vector<1x8x56xbf16> to vector<1x8x56xbf16>
    %36 = vector.broadcast %35 : vector<1x8x56xbf16> to vector<8x8x56xbf16>
    %c0_31 = arith.constant 0 : index
    %c0_32 = arith.constant 0 : index
    %c0_33 = arith.constant 0 : index
    %37 = vector.load %arg6[%c0_31, %c0_32, %c0_33] : memref<8x56x128xbf16, #tpu.memory_space<vmem>>, vector<8x56x128xbf16>
    "tpu.trace_start"() <{level = 10 : i32, message = "bof,bfv->bov"}> : () -> ()
    %cst_34 = arith.constant dense<0.000000e+00> : vector<8x8x128xf32>
    %38 = tpu.matmul %36, %37, %cst_34 {dimension_numbers = #tpu.dot_dimension_numbers<[2], [1], [1], [2], [0, 0, 0, 1, 1, 2], [0], [0]>} : vector<8x8x56xbf16>, vector<8x56x128xbf16>, vector<8x8x128xf32> -> vector<8x8x128xf32>
    "tpu.trace_stop"() : () -> ()
    %c0_35 = arith.constant 0 : index
    %c0_36 = arith.constant 0 : index
    %c0_37 = arith.constant 0 : index
    %39 = vector.load %arg4[%c0_35, %c0_36, %c0_37] : memref<1x8x1xf32, #tpu.memory_space<vmem>>, vector<1x8x1xf32>
    %40 = vector.broadcast %39 : vector<1x8x1xf32> to vector<8x8x128xf32>
    %41 = arith.addf %38, %40 : vector<8x8x128xf32>
    %c0_38 = arith.constant 0 : index
    %c0_39 = arith.constant 0 : index
    %c0_40 = arith.constant 0 : index
    %42 = vector.load %arg5[%c0_38, %c0_39, %c0_40] : memref<8x8x128xf32, #tpu.memory_space<vmem>>, vector<8x8x128xf32>
    tpu.vector_store %arg5[%c0_38, %c0_39, %c0_40], %41 {strides = array<i32>} : memref<8x8x128xf32, #tpu.memory_space<vmem>>, vector<8x8x128xf32>,
    return
  }
  func.func @transform_0(%arg0: i32) -> (i32, i32, i32) {
    %c0_i32 = arith.constant 0 : i32
    %c0_i32_0 = arith.constant 0 : i32
    %c0_i32_1 = arith.constant 0 : i32
    %c0_i32_2 = arith.constant 0 : i32
    return %c0_i32, %c0_i32_0, %c0_i32_1 : i32, i32, i32
  }
  func.func @transform_1(%arg0: i32) -> (i32, i32, i32) {
    %c0_i32 = arith.constant 0 : i32
    %c0_i32_0 = arith.constant 0 : i32
    %c0_i32_1 = arith.constant 0 : i32
    return %arg0, %c0_i32, %c0_i32_0 : i32, i32, i32
  }
  func.func @transform_2(%arg0: i32) -> (i32, i32) {
    %c0_i32 = arith.constant 0 : i32
    %c0_i32_0 = arith.constant 0 : i32
    %c0_i32_1 = arith.constant 0 : i32
    return %c0_i32, %c0_i32_0 : i32, i32
  }
  func.func @transform_3(%arg0: i32) -> (i32, i32, i32) {
    %c0_i32 = arith.constant 0 : i32
    %c0_i32_0 = arith.constant 0 : i32
    %c0_i32_1 = arith.constant 0 : i32
    %c0_i32_2 = arith.constant 0 : i32
    return %c0_i32, %c0_i32_0, %c0_i32_1 : i32, i32, i32
  }
  func.func @transform_4(%arg0: i32) -> (i32, i32, i32) {
    %c0_i32 = arith.constant 0 : i32
    %c0_i32_0 = arith.constant 0 : i32
    %c0_i32_1 = arith.constant 0 : i32
    return %arg0, %c0_i32, %c0_i32_0 : i32, i32, i32
  }
}

</mosaic_0001>

<llo_original>
// kernel: tpu_custom_call.1
$region0: #{tpu_custom_call.1}
  #allocation0 [shape = 'u32[]', space=smem, size = 0x4, offset = 0x4, fixed_abs, tag = 'smem constant byte address 0x4 - core index']
  #allocation1 [shape = 'u32[144,128]{1,0:T(1,128)}', space=vmem, size = 0x12000, scoped, tag = 'internal scratch']
  #allocation2 [shape = 'bf16[8,56,128]{2,1,0:T(8,128)(2,1)}', space=vmem, size = 0x1c000, scoped, tag = 'scratch operand']
  %s0 = inlined_call_operand.hbm [shape: bf16[3,128,128], index: 0, kind: input, shape index: {}]
  %s1 = inlined_call_operand.hbm [shape: bf16[16,8,128], index: 1, kind: input, shape index: {}]
  %s2 = inlined_call_operand.vmem [shape: bf16[8,56], index: 2, kind: input, shape index: {}]
  %s3 = inlined_call_operand.vmem [shape: f32[1,8,1], index: 3, kind: input, shape index: {}]
  %s4 = inlined_call_operand.hbm [shape: f32[16,8,128], index: 4, kind: output, shape index: {}]
  %s5 = sld [smem:[#allocation0]]
  $region57: #{tpu_custom_call.1} parent=0
    _
  %s7 = ssub.s32 1, %s5
  %s8 = scalar_select 0, %s7, %s5
  $region1: #{tpu_custom_call.1} parent=0
    #allocation3 [shape = 'u8[98304]{0}', space=vmem, size = 0x18000, scoped, tag = 'input window, operand 0, single buffered']
    #allocation4 [shape = 's32[2]{0}', space=sflag, size = 0x8, scoped, tag = 'scoped memory for tpu_custom_call.1']
    #allocation5 [shape = 's32[2]{0}', space=sflag, size = 0x8, scoped, tag = 'scoped memory for tpu_custom_call.1']
    #allocation6 [shape = 'u8[32768]{0}', space=vmem, size = 0x8000, scoped, tag = 'input window, operand 1']
    #allocation7 [shape = 's32[2]{0}', space=sflag, size = 0x8, scoped, tag = 'scoped memory for tpu_custom_call.1']
    #allocation8 [shape = 'u8[65536]{0}', space=vmem, size = 0x10000, scoped, tag = 'output window, operand 0']
    %9 = vsyncpa [#allocation4], 0
    %10 = vsyncpa [#allocation7], 0
    %s11 = scalar_lea.sflag [#allocation7], 1
    %12 = vsyncpa %s11, 0
    %13 = vsyncpa [#allocation5], 0
    %s14 = scalar_lea.sflag [#allocation5], 1
    %15 = vsyncpa %s14, 0
    loop: start=0, step=1, limit=4
    $region2: #{tpu_custom_call.1} parent=1 // loop_pre_header
      _
    $region3: #{tpu_custom_call.1} parent=1 // loop_header
      %s17 = sphi 0, %s21
      %p18 = scmp.ge.s32.totalorder %s17, 4
      %s25 = sphi 0, %s25
      %s27 = sphi 0, %s25
      %s28 = sphi 0, %s27
      %s42 = sphi 0, %s28
      %s48 = sphi 0, %s50
      %s51 = sphi 0, %s48
      %s52 = sphi 0, %s51
      %s68 = sphi 0, %s52
      %s72 = sphi 0, %s72
      %s74 = sphi 0, %s72
      %s75 = sphi 0, %s74
      %s89 = sphi 0, %s75
      %s93 = sphi 0, %s93
      %s95 = sphi 0, %s93
      %s96 = sphi 0, %s95
      %s110 = sphi 0, %s96
      %s116 = sphi 0, %s118
      %s119 = sphi 0, %s116
      %s120 = sphi 0, %s119
      %s136 = sphi 0, %s120
    $region4: #{tpu_custom_call.1} parent=1 // loop_header_branch
      %20 = sbr.rel (%p18) target = $region8
    $region5: #{tpu_custom_call.1} parent=1 // loop_body
      %s22 = ssub.s32 %s17, 1
      %s23 = ssub.s32 %s17, 2
      %s24 = sadd.s32 %s17, 1
      %s26 = sadd.s32 %s25, 1
      %p29 = scmp.eq.s32.totalorder %s17, 1
      %p30 = scmp.ne.s32.totalorder %s25, %s27
      %p31 = scmp.eq.s32.totalorder %s17, 0
      %p32 = por %p30, %p31
      %p33 = scmp.ne.s32.totalorder %s25, %s27
      %p34 = scmp.eq.s32.totalorder %s22, 1
      %p35 = por %p33, %p34
      %p36 = scmp.ne.s32.totalorder %s27, %s28
      %p37 = scmp.eq.s32.totalorder %s22, 0
      %p38 = por %p36, %p37
      %p39 = scmp.ne.s32.totalorder %s27, %s28
      %p40 = scmp.eq.s32.totalorder %s23, 1
      %p41 = por %p39, %p40
      %p43 = scmp.ne.s32.totalorder %s28, %s42
      %p44 = scmp.eq.s32.totalorder %s23, 0
      %p45 = por %p43, %p44
      %s46 = ssub.s32 %s17, %s24
      %p47 = scmp.eq.s32.totalorder %s46, 0
      %s49 = sadd.s32 %s48, 1
      %s50 = scalar_select %p47, %s48, %s49
      %p53 = pneg %p47
      %p54 = scmp.eq.s32.totalorder %s17, 1
      %p55 = por %p53, %p54
      %p56 = scmp.ne.s32.totalorder %s48, %s51
      %p57 = scmp.eq.s32.totalorder %s17, 0
      %p58 = por %p56, %p57
      %p59 = scmp.ne.s32.totalorder %s48, %s51
      %p60 = scmp.eq.s32.totalorder %s22, 1
      %p61 = por %p59, %p60
      %p62 = scmp.ne.s32.totalorder %s51, %s52
      %p63 = scmp.eq.s32.totalorder %s22, 0
      %p64 = por %p62, %p63
      %p65 = scmp.ne.s32.totalorder %s51, %s52
      %p66 = scmp.eq.s32.totalorder %s23, 1
      %p67 = por %p65, %p66
      %p69 = scmp.ne.s32.totalorder %s52, %s68
      %p70 = scmp.eq.s32.totalorder %s23, 0
      %p71 = por %p69, %p70
      %s73 = sadd.s32 %s72, 1
      %p76 = scmp.eq.s32.totalorder %s17, 1
      %p77 = scmp.ne.s32.totalorder %s72, %s74
      %p78 = scmp.eq.s32.totalorder %s17, 0
      %p79 = por %p77, %p78
      %p80 = scmp.ne.s32.totalorder %s72, %s74
      %p81 = scmp.eq.s32.totalorder %s22, 1
      %p82 = por %p80, %p81
      %p83 = scmp.ne.s32.totalorder %s74, %s75
      %p84 = scmp.eq.s32.totalorder %s22, 0
      %p85 = por %p83, %p84
      %p86 = scmp.ne.s32.totalorder %s74, %s75
      %p87 = scmp.eq.s32.totalorder %s23, 1
      %p88 = por %p86, %p87
      %p90 = scmp.ne.s32.totalorder %s75, %s89
      %p91 = scmp.eq.s32.totalorder %s23, 0
      %p92 = por %p90, %p91
      %s94 = sadd.s32 %s93, 1
      %p97 = scmp.eq.s32.totalorder %s17, 1
      %p98 = scmp.ne.s32.totalorder %s93, %s95
      %p99 = scmp.eq.s32.totalorder %s17, 0
      %p100 = por %p98, %p99
      %p101 = scmp.ne.s32.totalorder %s93, %s95
      %p102 = scmp.eq.s32.totalorder %s22, 1
      %p103 = por %p101, %p102
      %p104 = scmp.ne.s32.totalorder %s95, %s96
      %p105 = scmp.eq.s32.totalorder %s22, 0
      %p106 = por %p104, %p105
      %p107 = scmp.ne.s32.totalorder %s95, %s96
      %p108 = scmp.eq.s32.totalorder %s23, 1
      %p109 = por %p107, %p108
      %p111 = scmp.ne.s32.totalorder %s96, %s110
      %p112 = scmp.eq.s32.totalorder %s23, 0
      %p113 = por %p111, %p112
      %s114 = ssub.s32 %s17, %s24
      %p115 = scmp.eq.s32.totalorder %s114, 0
      %s117 = sadd.s32 %s116, 1
      %s118 = scalar_select %p115, %s116, %s117
      %p121 = pneg %p115
      %p122 = scmp.eq.s32.totalorder %s17, 1
      %p123 = por %p121, %p122
      %p124 = scmp.ne.s32.totalorder %s116, %s119
      %p125 = scmp.eq.s32.totalorder %s17, 0
      %p126 = por %p124, %p125
      %p127 = scmp.ne.s32.totalorder %s116, %s119
      %p128 = scmp.eq.s32.totalorder %s22, 1
      %p129 = por %p127, %p128
      %p130 = scmp.ne.s32.totalorder %s119, %s120
      %p131 = scmp.eq.s32.totalorder %s22, 0
      %p132 = por %p130, %p131
      %p133 = scmp.ne.s32.totalorder %s119, %s120
      %p134 = scmp.eq.s32.totalorder %s23, 1
      %p135 = por %p133, %p134
      %p137 = scmp.ne.s32.totalorder %s120, %s136
      %p138 = scmp.eq.s32.totalorder %s23, 0
      %p139 = por %p137, %p138
      %p140 = scmp.le.s32.totalorder 1, %s17
      %p141 = scmp.lt.s32.totalorder %s17, 3
      %p142 = pnand %p140, %p141
      %p143 = pneg %p142
      // Predicated region
      $region9: #{tpu_custom_call.1} parent=5 // pred_check
        _
      $region10: #{tpu_custom_call.1} parent=5 // pred_check_branch
        %145 = sbr.rel (%p142) target = $region12
      $region11: #{tpu_custom_call.1} parent=5 // pred_region
        %s146 = ssub.s32 %s17, 1
        // Predicated region
        $region13: #{tpu_custom_call.1} parent=11 // pred_check
          %p147 = pneg %p38
        $region14: #{tpu_custom_call.1} parent=11 // pred_check_branch
          %149 = sbr.rel (%p147) target = $region16
        $region15: #{tpu_custom_call.1} parent=11 // pred_region
          %s151 = ssub.s32 3072, 3072
          %152 = vsyncadd [#allocation4], %s151
          %s153 = sshll.u32 [#allocation3], 4
          %s154 = int_to_ptr.vmem [resolvable:$true] %s153
          %159 = dma.hbm_to_vmem [thread:$0]  %s0, 3072, %s154, [#allocation4], 64, 64, 4
        $region16: #{tpu_custom_call.1} parent=11 // pred_fallthru
          _
        // Predicated region
        $region17: #{tpu_custom_call.1} parent=11 // pred_check
          %p160 = pneg %p85
        $region18: #{tpu_custom_call.1} parent=11 // pred_check_branch
          %162 = sbr.rel (%p160) target = $region20
        $region19: #{tpu_custom_call.1} parent=11 // pred_region
          _
        $region20: #{tpu_custom_call.1} parent=11 // pred_fallthru
          _
        // Predicated region
        $region21: #{tpu_custom_call.1} parent=11 // pred_check
          %p163 = pneg %p106
        $region22: #{tpu_custom_call.1} parent=11 // pred_check_branch
          %165 = sbr.rel (%p163) target = $region24
        $region23: #{tpu_custom_call.1} parent=11 // pred_region
          _
        $region24: #{tpu_custom_call.1} parent=11 // pred_fallthru
          _
      $region12: #{tpu_custom_call.1} parent=5 // pred_fallthru
        _
      %p166 = scmp.lt.s32.totalorder %s17, 2
      // Predicated region
      $region25: #{tpu_custom_call.1} parent=5 // pred_check
        %p167 = pneg %p166
      $region26: #{tpu_custom_call.1} parent=5 // pred_check_branch
        %169 = sbr.rel (%p167) target = $region28
      $region27: #{tpu_custom_call.1} parent=5 // pred_region
        // Predicated region
        $region29: #{tpu_custom_call.1} parent=27 // pred_check
          %p170 = pneg %p58
        $region30: #{tpu_custom_call.1} parent=27 // pred_check_branch
          %172 = sbr.rel (%p170) target = $region32
        $region31: #{tpu_custom_call.1} parent=27 // pred_region
          %s173 = sand.u32 %s48, 1
          %s174 = scalar_lea.sflag [#allocation7], %s173
          %s175 = sand.u32 %s48, 1
          %s176 = smul.addr %s175, 32
          %s177 = scalar_lea.vmem [#allocation6], %s176
          %s178 = smul.u32 8, %s17
          %s180 = ssub.s32 512, 512
          %181 = vsyncadd %s174, %s180
          %s182 = smul.addr %s178, 64
          %s183 = scalar_lea.hbm %s1, %s182
          %s184 = sshll.u32 %s177, 4
          %s185 = int_to_ptr.vmem [resolvable:$true] %s184
          %190 = dma.hbm_to_vmem [thread:$0]  %s183, 512, %s185, %s174, 64, 64, 4
        $region32: #{tpu_custom_call.1} parent=27 // pred_fallthru
          _
      $region28: #{tpu_custom_call.1} parent=5 // pred_fallthru
        _
      %p191 = scmp.le.s32.totalorder 1, %s17
      %p192 = scmp.lt.s32.totalorder %s17, 3
      %p193 = pnand %p191, %p192
      %p194 = pneg %p193
      // Predicated region
      $region33: #{tpu_custom_call.1} parent=5 // pred_check
        _
      $region34: #{tpu_custom_call.1} parent=5 // pred_check_branch
        %196 = sbr.rel (%p193) target = $region36
      $region35: #{tpu_custom_call.1} parent=5 // pred_region
        %s197 = ssub.s32 %s17, 1
        // Predicated region
        $region37: #{tpu_custom_call.1} parent=35 // pred_check
          %p198 = pneg %p38
        $region38: #{tpu_custom_call.1} parent=35 // pred_check_branch
          %200 = sbr.rel (%p198) target = $region40
        $region39: #{tpu_custom_call.1} parent=35 // pred_region
          %201 = dma.done [#allocation4], 3072
        $region40: #{tpu_custom_call.1} parent=35 // pred_fallthru
          _
        %s202 = sand.u32 %s51, 1
        %s203 = scalar_lea.sflag [#allocation7], %s202
        %s204 = sand.u32 %s51, 1
        %s205 = smul.addr %s204, 32
        %s206 = scalar_lea.vmem [#allocation6], %s205
        // Predicated region
        $region41: #{tpu_custom_call.1} parent=35 // pred_check
          %p207 = pneg %p64
        $region42: #{tpu_custom_call.1} parent=35 // pred_check_branch
          %209 = sbr.rel (%p207) target = $region44
        $region43: #{tpu_custom_call.1} parent=35 // pred_region
          %210 = dma.done %s203, 512
        $region44: #{tpu_custom_call.1} parent=35 // pred_fallthru
          _
        %p211 = pneg %p38
        %p212 = pneg %p35
        %s213 = sand.u32 %s51, 1
        %s214 = scalar_lea.sflag [#allocation7], %s213
        %s215 = sand.u32 %s51, 1
        %s216 = smul.addr %s215, 32
        %s217 = scalar_lea.vmem [#allocation6], %s216
        %p218 = pneg %p64
        %p219 = pneg %p61
        %p220 = pneg %p85
        %p221 = pneg %p82
        %p222 = pneg %p106
        %p223 = pneg %p103
        %p224 = pneg %p132
        %p225 = pneg %p129
        %s226 = sand.u32 %s119, 1
        %s227 = scalar_lea.sflag [#allocation5], %s226
        %s228 = sand.u32 %s119, 1
        %s229 = smul.addr %s228, 64
        %s230 = scalar_lea.vmem [#allocation8], %s229
        %s231 = smul.u32 8, %s22
        %s232 = smul.u32 8, %s22
        %v234 = vld [vmem:[%s206] sm:$0xf]
        %v235 = vld [vmem:[%s206 + $0x4] sm:$0xf]
        %v236 = vld [vmem:[%s206 + $0x8] sm:$0xf]
        %v237 = vld [vmem:[%s206 + $0xc] sm:$0xf]
        %v238 = vld [vmem:[%s206 + $0x10] sm:$0xf]
        %v239 = vld [vmem:[%s206 + $0x14] sm:$0xf]
        %v240 = vld [vmem:[%s206 + $0x18] sm:$0xf]
        %v241 = vld [vmem:[%s206 + $0x1c] sm:$0xf]
        %242 = vst [vmem:[#allocation2] sm:$0xf] %v234
        %243 = vst [vmem:[#allocation2 + $0x1c] sm:$0xf] %v235
        %244 = vst [vmem:[#allocation2 + $0x38] sm:$0xf] %v236
        %245 = vst [vmem:[#allocation2 + $0x54] sm:$0xf] %v237
        %246 = vst [vmem:[#allocation2 + $0x70] sm:$0xf] %v238
        %247 = vst [vmem:[#allocation2 + $0x8c] sm:$0xf] %v239
        %248 = vst [vmem:[#allocation2 + $0xa8] sm:$0xf] %v240
        %249 = vst [vmem:[#allocation2 + $0xc4] sm:$0xf] %v241
        %v250 = vld [vmem:[#allocation3] sm:$0xf]
        %v251 = vld [vmem:[#allocation3 + $0x4] sm:$0xf]
        %v252 = vld [vmem:[#allocation3 + $0x8] sm:$0xf]
        %v253 = vld [vmem:[#allocation3 + $0xc] sm:$0xf]
        %v254 = vld [vmem:[#allocation3 + $0x10] sm:$0xf]
        %v255 = vld [vmem:[#allocation3 + $0x14] sm:$0xf]
        %v256 = vld [vmem:[#allocation3 + $0x18] sm:$0xf]
        %v257 = vld [vmem:[#allocation3 + $0x1c] sm:$0xf]
        %v258 = vld [vmem:[#allocation3 + $0x20] sm:$0xf]
        %v259 = vld [vmem:[#allocation3 + $0x24] sm:$0xf]
        %v260 = vld [vmem:[#allocation3 + $0x28] sm:$0xf]
        %v261 = vld [vmem:[#allocation3 + $0x2c] sm:$0xf]
        %v262 = vld [vmem:[#allocation3 + $0x30] sm:$0xf]
        %v263 = vld [vmem:[#allocation3 + $0x34] sm:$0xf]
        %v264 = vld [vmem:[#allocation3 + $0x38] sm:$0xf]
        %v265 = vld [vmem:[#allocation3 + $0x3c] sm:$0xf]
        %v274 = vunpack.c.l.b16 %v234
        %v275 = vunpack.c.l.b16 %v235
        %v276 = vunpack.c.l.b16 %v236
        %v277 = vunpack.c.l.b16 %v237
        %v278 = vunpack.c.l.b16 %v238
        %v279 = vunpack.c.l.b16 %v239
        %v280 = vunpack.c.l.b16 %v240
        %v281 = vunpack.c.l.b16 %v241
        %v282 = vpack.c.b16 %v275, %v274
        %v283 = vpack.c.b16 %v277, %v276
        %v284 = vpack.c.b16 %v279, %v278
        %v285 = vpack.c.b16 %v281, %v280
        %v306 = vunpack.c.l.b16 %v250
        %v307 = vunpack.c.l.b16 %v251
        %v308 = vunpack.c.l.b16 %v252
        %v309 = vunpack.c.l.b16 %v253
        %v310 = vunpack.c.l.b16 %v254
        %v311 = vunpack.c.l.b16 %v255
        %v312 = vunpack.c.l.b16 %v256
        %v313 = vunpack.c.l.b16 %v257
        %v314 = vunpack.c.l.b16 %v258
        %v315 = vunpack.c.l.b16 %v259
        %v316 = vunpack.c.l.b16 %v260
        %v317 = vunpack.c.l.b16 %v261
        %v318 = vunpack.c.l.b16 %v262
        %v319 = vunpack.c.l.b16 %v263
        %v320 = vunpack.c.l.b16 %v264
        %v321 = vunpack.c.l.b16 %v265
        %v322 = vpack.c.b16 %v307, %v306
        %v323 = vpack.c.b16 %v309, %v308
        %v324 = vpack.c.b16 %v311, %v310
        %v325 = vpack.c.b16 %v313, %v312
        %v326 = vpack.c.b16 %v315, %v314
        %v327 = vpack.c.b16 %v317, %v316
        %v328 = vpack.c.b16 %v319, %v318
        %v329 = vpack.c.b16 %v321, %v320
        %338 = vmatprep.subr.bf16.mxu0 0
        %339 = vmatpush1.bf16.msra.mxu0 %v322
        %340 = vmatprep.subr.bf16.mxu0 0
        %341 = vmatpush1.bf16.msra.mxu0 %v323
        %342 = vmatprep.subr.bf16.mxu0 0
        %343 = vmatpush1.bf16.msra.mxu0 %v324
        %344 = vmatprep.subr.bf16.mxu0 0
        %345 = vmatpush1.bf16.msra.mxu0 %v325
        %346 = vmatprep.subr.bf16.mxu0 0
        %347 = vmatpush1.bf16.msra.mxu0 %v326
        %348 = vmatprep.subr.bf16.mxu0 0
        %349 = vmatpush1.bf16.msra.mxu0 %v327
        %350 = vmatprep.subr.bf16.mxu0 0
        %351 = vmatpush1.bf16.msra.mxu0 %v328
        %352 = vmatprep.subr.bf16.mxu0 0
        %353 = vmatpush1.bf16.msra.mxu0 %v329
        %354 = vmatprep.subr.bf16.mxu0 0
        %355 = vmatpush1.bf16.msra.mxu0 0
        %356 = vmatprep.subr.bf16.mxu0 0
        %357 = vmatpush1.bf16.msra.mxu0 0
        %358 = vmatprep.subr.bf16.mxu0 0
        %359 = vmatpush1.bf16.msra.mxu0 0
        %360 = vmatprep.subr.bf16.mxu0 0
        %361 = vmatpush1.bf16.msra.mxu0 0
        %362 = vmatprep.subr.bf16.mxu0 0
        %363 = vmatpush1.bf16.msra.mxu0 0
        %364 = vmatprep.subr.bf16.mxu0 0
        %365 = vmatpush1.bf16.msra.mxu0 0
        %366 = vmatprep.subr.bf16.mxu0 0
        %367 = vmatpush1.bf16.msra.mxu0 0
        %368 = vmatprep.subr.bf16.mxu0 0
        %369 = vmatpush1.bf16.msra.mxu0 0
        %370 = vmatprep.mubr.bf16.mxu0 0
        %371 = vmatmul.mubr.bf16.gmra.mrb[0].mxu0 %v282
        %v372 = vpop.f32.mrb[0].mxu0
        %v373 = vadd.f32 0.0, %v372
        %v374 = vpop.f32.mrb[0].mxu0
        %v375 = vpop.f32.mrb[0].mxu0
        %v376 = vadd.f32 0.0, %v375
        %v377 = vpop.f32.mrb[0].mxu0
        %378 = vmatprep.mubr.bf16.mxu0 0
        %379 = vmatmul.mubr.bf16.gmra.mrb[0].mxu0 %v283
        %v380 = vpop.f32.mrb[0].mxu0
        %v381 = vadd.f32 0.0, %v380
        %v382 = vpop.f32.mrb[0].mxu0
        %v383 = vpop.f32.mrb[0].mxu0
        %v384 = vadd.f32 0.0, %v383
        %v385 = vpop.f32.mrb[0].mxu0
        %386 = vmatprep.mubr.bf16.mxu0 0
        %387 = vmatmul.mubr.bf16.gmra.mrb[0].mxu0 %v284
        %v388 = vpop.f32.mrb[0].mxu0
        %v389 = vadd.f32 0.0, %v388
        %v390 = vpop.f32.mrb[0].mxu0
        %v391 = vpop.f32.mrb[0].mxu0
        %v392 = vadd.f32 0.0, %v391
        %v393 = vpop.f32.mrb[0].mxu0
        %394 = vmatprep.mubr.bf16.mxu0 0
        %395 = vmatmul.mubr.bf16.gmra.mrb[0].mxu0 %v285
        %v396 = vpop.f32.mrb[0].mxu0
        %v397 = vadd.f32 0.0, %v396
        %v398 = vpop.f32.mrb[0].mxu0
        %v399 = vpop.f32.mrb[0].mxu0
        %v400 = vadd.f32 0.0, %v399
        %v401 = vpop.f32.mrb[0].mxu0
        %402 = vdwg.mxu0
        %v403 = vpack.c.bf16 %v376, %v373
        %v404 = vpack.c.bf16 %v384, %v381
        %v405 = vpack.c.bf16 %v392, %v389
        %v406 = vpack.c.bf16 %v400, %v397
        %v411 = vunpack.c.l.b16 %v403
        %v412 = vunpack.c.h.b16 %v403
        %v413 = vunpack.c.l.b16 %v404
        %v414 = vunpack.c.h.b16 %v404
        %v415 = vunpack.c.l.b16 %v405
        %v416 = vunpack.c.h.b16 %v405
        %v417 = vunpack.c.l.b16 %v406
        %v418 = vunpack.c.h.b16 %v406
        %v419 = vpack.c.b16 %v411, %v411
        %v420 = vpack.c.b16 %v412, %v412
        %v421 = vpack.c.b16 %v413, %v413
        %v422 = vpack.c.b16 %v414, %v414
        %v423 = vpack.c.b16 %v415, %v415
        %v424 = vpack.c.b16 %v416, %v416
        %v425 = vpack.c.b16 %v417, %v417
        %v426 = vpack.c.b16 %v418, %v418
        %435 = vst [vmem:[#allocation2 + $0x4] sm:$0xf] %v419
        %436 = vst [vmem:[#allocation2 + $0x20] sm:$0xf] %v420
        %437 = vst [vmem:[#allocation2 + $0x3c] sm:$0xf] %v421
        %438 = vst [vmem:[#allocation2 + $0x58] sm:$0xf] %v422
        %439 = vst [vmem:[#allocation2 + $0x74] sm:$0xf] %v423
        %440 = vst [vmem:[#allocation2 + $0x90] sm:$0xf] %v424
        %441 = vst [vmem:[#allocation2 + $0xac] sm:$0xf] %v425
        %442 = vst [vmem:[#allocation2 + $0xc8] sm:$0xf] %v426
        %443 = vmatprep.subr.bf16.mxu0 0
        %444 = vmatpush1.bf16.msra.mxu0 %v322
        %445 = vmatprep.subr.bf16.mxu0 0
        %446 = vmatpush1.bf16.msra.mxu0 %v323
        %447 = vmatprep.subr.bf16.mxu0 0
        %448 = vmatpush1.bf16.msra.mxu0 %v324
        %449 = vmatprep.subr.bf16.mxu0 0
        %450 = vmatpush1.bf16.msra.mxu0 %v325
        %451 = vmatprep.subr.bf16.mxu0 0
        %452 = vmatpush1.bf16.msra.mxu0 %v326
        %453 = vmatprep.subr.bf16.mxu0 0
        %454 = vmatpush1.bf16.msra.mxu0 %v327
        %455 = vmatprep.subr.bf16.mxu0 0
        %456 = vmatpush1.bf16.msra.mxu0 %v328
        %457 = vmatprep.subr.bf16.mxu0 0
        %458 = vmatpush1.bf16.msra.mxu0 %v329
        %459 = vmatprep.subr.bf16.mxu0 0
        %460 = vmatpush1.bf16.msra.mxu0 0
        %461 = vmatprep.subr.bf16.mxu0 0
        %462 = vmatpush1.bf16.msra.mxu0 0
        %463 = vmatprep.subr.bf16.mxu0 0
        %464 = vmatpush1.bf16.msra.mxu0 0
        %465 = vmatprep.subr.bf16.mxu0 0
        %466 = vmatpush1.bf16.msra.mxu0 0
        %467 = vmatprep.subr.bf16.mxu0 0
        %468 = vmatpush1.bf16.msra.mxu0 0
        %469 = vmatprep.subr.bf16.mxu0 0
        %470 = vmatpush1.bf16.msra.mxu0 0
        %471 = vmatprep.subr.bf16.mxu0 0
        %472 = vmatpush1.bf16.msra.mxu0 0
        %473 = vmatprep.subr.bf16.mxu0 0
        %474 = vmatpush1.bf16.msra.mxu0 0
        %475 = vmatprep.mubr.bf16.mxu0 0
        %476 = vmatmul.mubr.bf16.gmra.mrb[0].mxu0 %v403
        %v477 = vpop.f32.mrb[0].mxu0
        %v478 = vadd.f32 0.0, %v477
        %v479 = vpop.f32.mrb[0].mxu0
        %v480 = vpop.f32.mrb[0].mxu0
        %v481 = vadd.f32 0.0, %v480
        %v482 = vpop.f32.mrb[0].mxu0
        %483 = vmatprep.mubr.bf16.mxu0 0
        %484 = vmatmul.mubr.bf16.gmra.mrb[0].mxu0 %v404
        %v485 = vpop.f32.mrb[0].mxu0
        %v486 = vadd.f32 0.0, %v485
        %v487 = vpop.f32.mrb[0].mxu0
        %v488 = vpop.f32.mrb[0].mxu0
        %v489 = vadd.f32 0.0, %v488
        %v490 = vpop.f32.mrb[0].mxu0
        %491 = vmatprep.mubr.bf16.mxu0 0
        %492 = vmatmul.mubr.bf16.gmra.mrb[0].mxu0 %v405
        %v493 = vpop.f32.mrb[0].mxu0
        %v494 = vadd.f32 0.0, %v493
        %v495 = vpop.f32.mrb[0].mxu0
        %v496 = vpop.f32.mrb[0].mxu0
        %v497 = vadd.f32 0.0, %v496
        %v498 = vpop.f32.mrb[0].mxu0
        %499 = vmatprep.mubr.bf16.mxu0 0
        %500 = vmatmul.mubr.bf16.gmra.mrb[0].mxu0 %v406
        %v501 = vpop.f32.mrb[0].mxu0
        %v502 = vadd.f32 0.0, %v501
        %v503 = vpop.f32.mrb[0].mxu0
        %v504 = vpop.f32.mrb[0].mxu0
        %v505 = vadd.f32 0.0, %v504
        %v506 = vpop.f32.mrb[0].mxu0
        %507 = vdwg.mxu0
        %v508 = vpack.c.bf16 %v481, %v478
        %v509 = vpack.c.bf16 %v489, %v486
        %v510 = vpack.c.bf16 %v497, %v494
        %v511 = vpack.c.bf16 %v505, %v502
        %v516 = vunpack.c.l.b16 %v508
        %v517 = vunpack.c.h.b16 %v508
        %v518 = vunpack.c.l.b16 %v509
        %v519 = vunpack.c.h.b16 %v509
        %v520 = vunpack.c.l.b16 %v510
        %v521 = vunpack.c.h.b16 %v510
        %v522 = vunpack.c.l.b16 %v511
        %v523 = vunpack.c.h.b16 %v511
        %v524 = vpack.c.b16 %v516, %v516
        %v525 = vpack.c.b16 %v517, %v517
        %v526 = vpack.c.b16 %v518, %v518
        %v527 = vpack.c.b16 %v519, %v519
        %v528 = vpack.c.b16 %v520, %v520
        %v529 = vpack.c.b16 %v521, %v521
        %v530 = vpack.c.b16 %v522, %v522
        %v531 = vpack.c.b16 %v523, %v523
        %540 = vst [vmem:[#allocation2 + $0x8] sm:$0xf] %v524
        %541 = vst [vmem:[#allocation2 + $0x24] sm:$0xf] %v525
        %542 = vst [vmem:[#allocation2 + $0x40] sm:$0xf] %v526
        %543 = vst [vmem:[#allocation2 + $0x5c] sm:$0xf] %v527
        %544 = vst [vmem:[#allocation2 + $0x78] sm:$0xf] %v528
        %545 = vst [vmem:[#allocation2 + $0x94] sm:$0xf] %v529
        %546 = vst [vmem:[#allocation2 + $0xb0] sm:$0xf] %v530
        %547 = vst [vmem:[#allocation2 + $0xcc] sm:$0xf] %v531
        %s548 = scalar_lea.vmem [#allocation3], 64
        %v549 = vld [vmem:[%s548] sm:$0xf]
        %v550 = vld [vmem:[%s548 + $0x4] sm:$0xf]
        %v551 = vld [vmem:[%s548 + $0x8] sm:$0xf]
        %v552 = vld [vmem:[%s548 + $0xc] sm:$0xf]
        %v553 = vld [vmem:[%s548 + $0x10] sm:$0xf]
        %v554 = vld [vmem:[%s548 + $0x14] sm:$0xf]
        %v555 = vld [vmem:[%s548 + $0x18] sm:$0xf]
        %v556 = vld [vmem:[%s548 + $0x1c] sm:$0xf]
        %v557 = vld [vmem:[%s548 + $0x20] sm:$0xf]
        %v558 = vld [vmem:[%s548 + $0x24] sm:$0xf]
        %v559 = vld [vmem:[%s548 + $0x28] sm:$0xf]
        %v560 = vld [vmem:[%s548 + $0x2c] sm:$0xf]
        %v561 = vld [vmem:[%s548 + $0x30] sm:$0xf]
        %v562 = vld [vmem:[%s548 + $0x34] sm:$0xf]
        %v563 = vld [vmem:[%s548 + $0x38] sm:$0xf]
        %v564 = vld [vmem:[%s548 + $0x3c] sm:$0xf]
        %v581 = vunpack.c.l.b16 %v549
        %v582 = vunpack.c.l.b16 %v550
        %v583 = vunpack.c.l.b16 %v551
        %v584 = vunpack.c.l.b16 %v552
        %v585 = vunpack.c.l.b16 %v553
        %v586 = vunpack.c.l.b16 %v554
        %v587 = vunpack.c.l.b16 %v555
        %v588 = vunpack.c.l.b16 %v556
        %v589 = vunpack.c.l.b16 %v557
        %v590 = vunpack.c.l.b16 %v558
        %v591 = vunpack.c.l.b16 %v559
        %v592 = vunpack.c.l.b16 %v560
        %v593 = vunpack.c.l.b16 %v561
        %v594 = vunpack.c.l.b16 %v562
        %v595 = vunpack.c.l.b16 %v563
        %v596 = vunpack.c.l.b16 %v564
        %v597 = vpack.c.b16 %v582, %v581
        %v598 = vpack.c.b16 %v584, %v583
        %v599 = vpack.c.b16 %v586, %v585
        %v600 = vpack.c.b16 %v588, %v587
        %v601 = vpack.c.b16 %v590, %v589
        %v602 = vpack.c.b16 %v592, %v591
        %v603 = vpack.c.b16 %v594, %v593
        %v604 = vpack.c.b16 %v596, %v595
        %613 = vmatprep.subr.bf16.mxu0 0
        %614 = vmatpush1.bf16.msra.mxu0 %v597
        %615 = vmatprep.subr.bf16.mxu0 0
        %616 = vmatpush1.bf16.msra.mxu0 %v598
        %617 = vmatprep.subr.bf16.mxu0 0
        %618 = vmatpush1.bf16.msra.mxu0 %v599
        %619 = vmatprep.subr.bf16.mxu0 0
        %620 = vmatpush1.bf16.msra.mxu0 %v600
        %621 = vmatprep.subr.bf16.mxu0 0
        %622 = vmatpush1.bf16.msra.mxu0 %v601
        %623 = vmatprep.subr.bf16.mxu0 0
        %624 = vmatpush1.bf16.msra.mxu0 %v602
        %625 = vmatprep.subr.bf16.mxu0 0
        %626 = vmatpush1.bf16.msra.mxu0 %v603
        %627 = vmatprep.subr.bf16.mxu0 0
        %628 = vmatpush1.bf16.msra.mxu0 %v604
        %629 = vmatprep.subr.bf16.mxu0 0
        %630 = vmatpush1.bf16.msra.mxu0 0
        %631 = vmatprep.subr.bf16.mxu0 0
        %632 = vmatpush1.bf16.msra.mxu0 0
        %633 = vmatprep.subr.bf16.mxu0 0
        %634 = vmatpush1.bf16.msra.mxu0 0
        %635 = vmatprep.subr.bf16.mxu0 0
        %636 = vmatpush1.bf16.msra.mxu0 0
        %637 = vmatprep.subr.bf16.mxu0 0
        %638 = vmatpush1.bf16.msra.mxu0 0
        %639 = vmatprep.subr.bf16.mxu0 0
        %640 = vmatpush1.bf16.msra.mxu0 0
        %641 = vmatprep.subr.bf16.mxu0 0
        %642 = vmatpush1.bf16.msra.mxu0 0
        %643 = vmatprep.subr.bf16.mxu0 0
        %644 = vmatpush1.bf16.msra.mxu0 0
        %645 = vmatprep.mubr.bf16.mxu0 0
        %646 = vmatmul.mubr.bf16.gmra.mrb[0].mxu0 %v282
        %v647 = vpop.f32.mrb[0].mxu0
        %v648 = vadd.f32 0.0, %v647
        %v649 = vpop.f32.mrb[0].mxu0
        %v650 = vpop.f32.mrb[0].mxu0
        %v651 = vadd.f32 0.0, %v650
        %v652 = vpop.f32.mrb[0].mxu0
        %653 = vmatprep.mubr.bf16.mxu0 0
        %654 = vmatmul.mubr.bf16.gmra.mrb[0].mxu0 %v283
        %v655 = vpop.f32.mrb[0].mxu0
        %v656 = vadd.f32 0.0, %v655
        %v657 = vpop.f32.mrb[0].mxu0
        %v658 = vpop.f32.mrb[0].mxu0
        %v659 = vadd.f32 0.0, %v658
        %v660 = vpop.f32.mrb[0].mxu0
        %661 = vmatprep.mubr.bf16.mxu0 0
        %662 = vmatmul.mubr.bf16.gmra.mrb[0].mxu0 %v284
        %v663 = vpop.f32.mrb[0].mxu0
        %v664 = vadd.f32 0.0, %v663
        %v665 = vpop.f32.mrb[0].mxu0
        %v666 = vpop.f32.mrb[0].mxu0
        %v667 = vadd.f32 0.0, %v666
        %v668 = vpop.f32.mrb[0].mxu0
        %669 = vmatprep.mubr.bf16.mxu0 0
        %670 = vmatmul.mubr.bf16.gmra.mrb[0].mxu0 %v285
        %v671 = vpop.f32.mrb[0].mxu0
        %v672 = vadd.f32 0.0, %v671
        %v673 = vpop.f32.mrb[0].mxu0
        %v674 = vpop.f32.mrb[0].mxu0
        %v675 = vadd.f32 0.0, %v674
        %v676 = vpop.f32.mrb[0].mxu0
        %677 = vdwg.mxu0
        %v678 = vpack.c.bf16 %v651, %v648
        %v679 = vpack.c.bf16 %v659, %v656
        %v680 = vpack.c.bf16 %v667, %v664
        %v681 = vpack.c.bf16 %v675, %v672
        %v686 = vunpack.c.l.b16 %v678
        %v687 = vunpack.c.h.b16 %v678
        %v688 = vunpack.c.l.b16 %v679
        %v689 = vunpack.c.h.b16 %v679
        %v690 = vunpack.c.l.b16 %v680
        %v691 = vunpack.c.h.b16 %v680
        %v692 = vunpack.c.l.b16 %v681
        %v693 = vunpack.c.h.b16 %v681
        %v694 = vpack.c.b16 %v686, %v686
        %v695 = vpack.c.b16 %v687, %v687
        %v696 = vpack.c.b16 %v688, %v688
        %v697 = vpack.c.b16 %v689, %v689
        %v698 = vpack.c.b16 %v690, %v690
        %v699 = vpack.c.b16 %v691, %v691
        %v700 = vpack.c.b16 %v692, %v692
        %v701 = vpack.c.b16 %v693, %v693
        %710 = vst [vmem:[#allocation2 + $0xc] sm:$0xf] %v694
        %711 = vst [vmem:[#allocation2 + $0x28] sm:$0xf] %v695
        %712 = vst [vmem:[#allocation2 + $0x44] sm:$0xf] %v696
        %713 = vst [vmem:[#allocation2 + $0x60] sm:$0xf] %v697
        %714 = vst [vmem:[#allocation2 + $0x7c] sm:$0xf] %v698
        %715 = vst [vmem:[#allocation2 + $0x98] sm:$0xf] %v699
        %716 = vst [vmem:[#allocation2 + $0xb4] sm:$0xf] %v700
        %717 = vst [vmem:[#allocation2 + $0xd0] sm:$0xf] %v701
        %718 = vmatprep.subr.bf16.mxu0 0
        %719 = vmatpush1.bf16.msra.mxu0 %v597
        %720 = vmatprep.subr.bf16.mxu0 0
        %721 = vmatpush1.bf16.msra.mxu0 %v598
        %722 = vmatprep.subr.bf16.mxu0 0
        %723 = vmatpush1.bf16.msra.mxu0 %v599
        %724 = vmatprep.subr.bf16.mxu0 0
        %725 = vmatpush1.bf16.msra.mxu0 %v600
        %726 = vmatprep.subr.bf16.mxu0 0
        %727 = vmatpush1.bf16.msra.mxu0 %v601
        %728 = vmatprep.subr.bf16.mxu0 0
        %729 = vmatpush1.bf16.msra.mxu0 %v602
        %730 = vmatprep.subr.bf16.mxu0 0
        %731 = vmatpush1.bf16.msra.mxu0 %v603
        %732 = vmatprep.subr.bf16.mxu0 0
        %733 = vmatpush1.bf16.msra.mxu0 %v604
        %734 = vmatprep.subr.bf16.mxu0 0
        %735 = vmatpush1.bf16.msra.mxu0 0
        %736 = vmatprep.subr.bf16.mxu0 0
        %737 = vmatpush1.bf16.msra.mxu0 0
        %738 = vmatprep.subr.bf16.mxu0 0
        %739 = vmatpush1.bf16.msra.mxu0 0
        %740 = vmatprep.subr.bf16.mxu0 0
        %741 = vmatpush1.bf16.msra.mxu0 0
        %742 = vmatprep.subr.bf16.mxu0 0
        %743 = vmatpush1.bf16.msra.mxu0 0
        %744 = vmatprep.subr.bf16.mxu0 0
        %745 = vmatpush1.bf16.msra.mxu0 0
        %746 = vmatprep.subr.bf16.mxu0 0
        %747 = vmatpush1.bf16.msra.mxu0 0
        %748 = vmatprep.subr.bf16.mxu0 0
        %749 = vmatpush1.bf16.msra.mxu0 0
        %750 = vmatprep.mubr.bf16.mxu0 0
        %751 = vmatmul.mubr.bf16.gmra.mrb[0].mxu0 %v678
        %v752 = vpop.f32.mrb[0].mxu0
        %v753 = vadd.f32 0.0, %v752
        %v754 = vpop.f32.mrb[0].mxu0
        %v755 = vpop.f32.mrb[0].mxu0
        %v756 = vadd.f32 0.0, %v755
        %v757 = vpop.f32.mrb[0].mxu0
        %758 = vmatprep.mubr.bf16.mxu0 0
        %759 = vmatmul.mubr.bf16.gmra.mrb[0].mxu0 %v679
        %v760 = vpop.f32.mrb[0].mxu0
        %v761 = vadd.f32 0.0, %v760
        %v762 = vpop.f32.mrb[0].mxu0
        %v763 = vpop.f32.mrb[0].mxu0
        %v764 = vadd.f32 0.0, %v763
        %v765 = vpop.f32.mrb[0].mxu0
        %766 = vmatprep.mubr.bf16.mxu0 0
        %767 = vmatmul.mubr.bf16.gmra.mrb[0].mxu0 %v680
        %v768 = vpop.f32.mrb[0].mxu0
        %v769 = vadd.f32 0.0, %v768
        %v770 = vpop.f32.mrb[0].mxu0
        %v771 = vpop.f32.mrb[0].mxu0
        %v772 = vadd.f32 0.0, %v771
        %v773 = vpop.f32.mrb[0].mxu0
        %774 = vmatprep.mubr.bf16.mxu0 0
        %775 = vmatmul.mubr.bf16.gmra.mrb[0].mxu0 %v681
        %v776 = vpop.f32.mrb[0].mxu0
        %v777 = vadd.f32 0.0, %v776
        %v778 = vpop.f32.mrb[0].mxu0
        %v779 = vpop.f32.mrb[0].mxu0
        %v780 = vadd.f32 0.0, %v779
        %v781 = vpop.f32.mrb[0].mxu0
        %782 = vdwg.mxu0
        %v783 = vpack.c.bf16 %v756, %v753
        %v784 = vpack.c.bf16 %v764, %v761
        %v785 = vpack.c.bf16 %v772, %v769
        %v786 = vpack.c.bf16 %v780, %v777
        %v791 = vunpack.c.l.b16 %v783
        %v792 = vunpack.c.h.b16 %v783
        %v793 = vunpack.c.l.b16 %v784
        %v794 = vunpack.c.h.b16 %v784
        %v795 = vunpack.c.l.b16 %v785
        %v796 = vunpack.c.h.b16 %v785
        %v797 = vunpack.c.l.b16 %v786
        %v798 = vunpack.c.h.b16 %v786
        %v799 = vpack.c.b16 %v791, %v791
        %v800 = vpack.c.b16 %v792, %v792
        %v801 = vpack.c.b16 %v793, %v793
        %v802 = vpack.c.b16 %v794, %v794
        %v803 = vpack.c.b16 %v795, %v795
        %v804 = vpack.c.b16 %v796, %v796
        %v805 = vpack.c.b16 %v797, %v797
        %v806 = vpack.c.b16 %v798, %v798
        %815 = vst [vmem:[#allocation2 + $0x10] sm:$0xf] %v799
        %816 = vst [vmem:[#allocation2 + $0x2c] sm:$0xf] %v800
        %817 = vst [vmem:[#allocation2 + $0x48] sm:$0xf] %v801
        %818 = vst [vmem:[#allocation2 + $0x64] sm:$0xf] %v802
        %819 = vst [vmem:[#allocation2 + $0x80] sm:$0xf] %v803
        %820 = vst [vmem:[#allocation2 + $0x9c] sm:$0xf] %v804
        %821 = vst [vmem:[#allocation2 + $0xb8] sm:$0xf] %v805
        %822 = vst [vmem:[#allocation2 + $0xd4] sm:$0xf] %v806
        %s823 = scalar_lea.vmem [#allocation3], 128
        %v824 = vld [vmem:[%s823] sm:$0xf]
        %v825 = vld [vmem:[%s823 + $0x4] sm:$0xf]
        %v826 = vld [vmem:[%s823 + $0x8] sm:$0xf]
        %v827 = vld [vmem:[%s823 + $0xc] sm:$0xf]
        %v828 = vld [vmem:[%s823 + $0x10] sm:$0xf]
        %v829 = vld [vmem:[%s823 + $0x14] sm:$0xf]
        %v830 = vld [vmem:[%s823 + $0x18] sm:$0xf]
        %v831 = vld [vmem:[%s823 + $0x1c] sm:$0xf]
        %v832 = vld [vmem:[%s823 + $0x20] sm:$0xf]
        %v833 = vld [vmem:[%s823 + $0x24] sm:$0xf]
        %v834 = vld [vmem:[%s823 + $0x28] sm:$0xf]
        %v835 = vld [vmem:[%s823 + $0x2c] sm:$0xf]
        %v836 = vld [vmem:[%s823 + $0x30] sm:$0xf]
        %v837 = vld [vmem:[%s823 + $0x34] sm:$0xf]
        %v838 = vld [vmem:[%s823 + $0x38] sm:$0xf]
        %v839 = vld [vmem:[%s823 + $0x3c] sm:$0xf]
        %v856 = vunpack.c.l.b16 %v824
        %v857 = vunpack.c.l.b16 %v825
        %v858 = vunpack.c.l.b16 %v826
        %v859 = vunpack.c.l.b16 %v827
        %v860 = vunpack.c.l.b16 %v828
        %v861 = vunpack.c.l.b16 %v829
        %v862 = vunpack.c.l.b16 %v830
        %v863 = vunpack.c.l.b16 %v831
        %v864 = vunpack.c.l.b16 %v832
        %v865 = vunpack.c.l.b16 %v833
        %v866 = vunpack.c.l.b16 %v834
        %v867 = vunpack.c.l.b16 %v835
        %v868 = vunpack.c.l.b16 %v836
        %v869 = vunpack.c.l.b16 %v837
        %v870 = vunpack.c.l.b16 %v838
        %v871 = vunpack.c.l.b16 %v839
        %v872 = vpack.c.b16 %v857, %v856
        %v873 = vpack.c.b16 %v859, %v858
        %v874 = vpack.c.b16 %v861, %v860
        %v875 = vpack.c.b16 %v863, %v862
        %v876 = vpack.c.b16 %v865, %v864
        %v877 = vpack.c.b16 %v867, %v866
        %v878 = vpack.c.b16 %v869, %v868
        %v879 = vpack.c.b16 %v871, %v870
        %888 = vmatprep.subr.bf16.mxu0 0
        %889 = vmatpush1.bf16.msra.mxu0 %v872
        %890 = vmatprep.subr.bf16.mxu0 0
        %891 = vmatpush1.bf16.msra.mxu0 %v873
        %892 = vmatprep.subr.bf16.mxu0 0
        %893 = vmatpush1.bf16.msra.mxu0 %v874
        %894 = vmatprep.subr.bf16.mxu0 0
        %895 = vmatpush1.bf16.msra.mxu0 %v875
        %896 = vmatprep.subr.bf16.mxu0 0
        %897 = vmatpush1.bf16.msra.mxu0 %v876
        %898 = vmatprep.subr.bf16.mxu0 0
        %899 = vmatpush1.bf16.msra.mxu0 %v877
        %900 = vmatprep.subr.bf16.mxu0 0
        %901 = vmatpush1.bf16.msra.mxu0 %v878
        %902 = vmatprep.subr.bf16.mxu0 0
        %903 = vmatpush1.bf16.msra.mxu0 %v879
        %904 = vmatprep.subr.bf16.mxu0 0
        %905 = vmatpush1.bf16.msra.mxu0 0
        %906 = vmatprep.subr.bf16.mxu0 0
        %907 = vmatpush1.bf16.msra.mxu0 0
        %908 = vmatprep.subr.bf16.mxu0 0
        %909 = vmatpush1.bf16.msra.mxu0 0
        %910 = vmatprep.subr.bf16.mxu0 0
        %911 = vmatpush1.bf16.msra.mxu0 0
        %912 = vmatprep.subr.bf16.mxu0 0
        %913 = vmatpush1.bf16.msra.mxu0 0
        %914 = vmatprep.subr.bf16.mxu0 0
        %915 = vmatpush1.bf16.msra.mxu0 0
        %916 = vmatprep.subr.bf16.mxu0 0
        %917 = vmatpush1.bf16.msra.mxu0 0
        %918 = vmatprep.subr.bf16.mxu0 0
        %919 = vmatpush1.bf16.msra.mxu0 0
        %920 = vmatprep.mubr.bf16.mxu0 0
        %921 = vmatmul.mubr.bf16.gmra.mrb[0].mxu0 %v282
        %v922 = vpop.f32.mrb[0].mxu0
        %v923 = vadd.f32 0.0, %v922
        %v924 = vpop.f32.mrb[0].mxu0
        %v925 = vpop.f32.mrb[0].mxu0
        %v926 = vadd.f32 0.0, %v925
        %v927 = vpop.f32.mrb[0].mxu0
        %928 = vmatprep.mubr.bf16.mxu0 0
        %929 = vmatmul.mubr.bf16.gmra.mrb[0].mxu0 %v283
        %v930 = vpop.f32.mrb[0].mxu0
        %v931 = vadd.f32 0.0, %v930
        %v932 = vpop.f32.mrb[0].mxu0
        %v933 = vpop.f32.mrb[0].mxu0
        %v934 = vadd.f32 0.0, %v933
        %v935 = vpop.f32.mrb[0].mxu0
        %936 = vmatprep.mubr.bf16.mxu0 0
        %937 = vmatmul.mubr.bf16.gmra.mrb[0].mxu0 %v284
        %v938 = vpop.f32.mrb[0].mxu0
        %v939 = vadd.f32 0.0, %v938
        %v940 = vpop.f32.mrb[0].mxu0
        %v941 = vpop.f32.mrb[0].mxu0
        %v942 = vadd.f32 0.0, %v941
        %v943 = vpop.f32.mrb[0].mxu0
        %944 = vmatprep.mubr.bf16.mxu0 0
        %945 = vmatmul.mubr.bf16.gmra.mrb[0].mxu0 %v285
        %v946 = vpop.f32.mrb[0].mxu0
        %v947 = vadd.f32 0.0, %v946
        %v948 = vpop.f32.mrb[0].mxu0
        %v949 = vpop.f32.mrb[0].mxu0
        %v950 = vadd.f32 0.0, %v949
        %v951 = vpop.f32.mrb[0].mxu0
        %952 = vdwg.mxu0
        %v953 = vpack.c.bf16 %v926, %v923
        %v954 = vpack.c.bf16 %v934, %v931
        %v955 = vpack.c.bf16 %v942, %v939
        %v956 = vpack.c.bf16 %v950, %v947
        %v961 = vunpack.c.l.b16 %v953
        %v962 = vunpack.c.h.b16 %v953
        %v963 = vunpack.c.l.b16 %v954
        %v964 = vunpack.c.h.b16 %v954
        %v965 = vunpack.c.l.b16 %v955
        %v966 = vunpack.c.h.b16 %v955
        %v967 = vunpack.c.l.b16 %v956
        %v968 = vunpack.c.h.b16 %v956
        %v969 = vpack.c.b16 %v961, %v961
        %v970 = vpack.c.b16 %v962, %v962
        %v971 = vpack.c.b16 %v963, %v963
        %v972 = vpack.c.b16 %v964, %v964
        %v973 = vpack.c.b16 %v965, %v965
        %v974 = vpack.c.b16 %v966, %v966
        %v975 = vpack.c.b16 %v967, %v967
        %v976 = vpack.c.b16 %v968, %v968
        %985 = vst [vmem:[#allocation2 + $0x14] sm:$0xf] %v969
        %986 = vst [vmem:[#allocation2 + $0x30] sm:$0xf] %v970
        %987 = vst [vmem:[#allocation2 + $0x4c] sm:$0xf] %v971
        %988 = vst [vmem:[#allocation2 + $0x68] sm:$0xf] %v972
        %989 = vst [vmem:[#allocation2 + $0x84] sm:$0xf] %v973
        %990 = vst [vmem:[#allocation2 + $0xa0] sm:$0xf] %v974
        %991 = vst [vmem:[#allocation2 + $0xbc] sm:$0xf] %v975
        %992 = vst [vmem:[#allocation2 + $0xd8] sm:$0xf] %v976
        %993 = vmatprep.subr.bf16.mxu0 0
        %994 = vmatpush1.bf16.msra.mxu0 %v872
        %995 = vmatprep.subr.bf16.mxu0 0
        %996 = vmatpush1.bf16.msra.mxu0 %v873
        %997 = vmatprep.subr.bf16.mxu0 0
        %998 = vmatpush1.bf16.msra.mxu0 %v874
        %999 = vmatprep.subr.bf16.mxu0 0
        %1000 = vmatpush1.bf16.msra.mxu0 %v875
        %1001 = vmatprep.subr.bf16.mxu0 0
        %1002 = vmatpush1.bf16.msra.mxu0 %v876
        %1003 = vmatprep.subr.bf16.mxu0 0
        %1004 = vmatpush1.bf16.msra.mxu0 %v877
        %1005 = vmatprep.subr.bf16.mxu0 0
        %1006 = vmatpush1.bf16.msra.mxu0 %v878
        %1007 = vmatprep.subr.bf16.mxu0 0
        %1008 = vmatpush1.bf16.msra.mxu0 %v879
        %1009 = vmatprep.subr.bf16.mxu0 0
        %1010 = vmatpush1.bf16.msra.mxu0 0
        %1011 = vmatprep.subr.bf16.mxu0 0
        %1012 = vmatpush1.bf16.msra.mxu0 0
        %1013 = vmatprep.subr.bf16.mxu0 0
        %1014 = vmatpush1.bf16.msra.mxu0 0
        %1015 = vmatprep.subr.bf16.mxu0 0
        %1016 = vmatpush1.bf16.msra.mxu0 0
        %1017 = vmatprep.subr.bf16.mxu0 0
        %1018 = vmatpush1.bf16.msra.mxu0 0
        %1019 = vmatprep.subr.bf16.mxu0 0
        %1020 = vmatpush1.bf16.msra.mxu0 0
        %1021 = vmatprep.subr.bf16.mxu0 0
        %1022 = vmatpush1.bf16.msra.mxu0 0
        %1023 = vmatprep.subr.bf16.mxu0 0
        %1024 = vmatpush1.bf16.msra.mxu0 0
        %1025 = vmatprep.mubr.bf16.mxu0 0
        %1026 = vmatmul.mubr.bf16.gmra.mrb[0].mxu0 %v953
        %v1027 = vpop.f32.mrb[0].mxu0
        %v1028 = vadd.f32 0.0, %v1027
        %v1029 = vpop.f32.mrb[0].mxu0
        %v1030 = vpop.f32.mrb[0].mxu0
        %v1031 = vadd.f32 0.0, %v1030
        %v1032 = vpop.f32.mrb[0].mxu0
        %1033 = vmatprep.mubr.bf16.mxu0 0
        %1034 = vmatmul.mubr.bf16.gmra.mrb[0].mxu0 %v954
        %v1035 = vpop.f32.mrb[0].mxu0
        %v1036 = vadd.f32 0.0, %v1035
        %v1037 = vpop.f32.mrb[0].mxu0
        %v1038 = vpop.f32.mrb[0].mxu0
        %v1039 = vadd.f32 0.0, %v1038
        %v1040 = vpop.f32.mrb[0].mxu0
        %1041 = vmatprep.mubr.bf16.mxu0 0
        %1042 = vmatmul.mubr.bf16.gmra.mrb[0].mxu0 %v955
        %v1043 = vpop.f32.mrb[0].mxu0
        %v1044 = vadd.f32 0.0, %v1043
        %v1045 = vpop.f32.mrb[0].mxu0
        %v1046 = vpop.f32.mrb[0].mxu0
        %v1047 = vadd.f32 0.0, %v1046
        %v1048 = vpop.f32.mrb[0].mxu0
        %1049 = vmatprep.mubr.bf16.mxu0 0
        %1050 = vmatmul.mubr.bf16.gmra.mrb[0].mxu0 %v956
        %v1051 = vpop.f32.mrb[0].mxu0
        %v1052 = vadd.f32 0.0, %v1051
        %v1053 = vpop.f32.mrb[0].mxu0
        %v1054 = vpop.f32.mrb[0].mxu0
        %v1055 = vadd.f32 0.0, %v1054
        %v1056 = vpop.f32.mrb[0].mxu0
        %1057 = vdwg.mxu0
        %v1058 = vpack.c.bf16 %v1031, %v1028
        %v1059 = vpack.c.bf16 %v1039, %v1036
        %v1060 = vpack.c.bf16 %v1047, %v1044
        %v1061 = vpack.c.bf16 %v1055, %v1052
        %v1066 = vunpack.c.l.b16 %v1058
        %v1067 = vunpack.c.h.b16 %v1058
        %v1068 = vunpack.c.l.b16 %v1059
        %v1069 = vunpack.c.h.b16 %v1059
        %v1070 = vunpack.c.l.b16 %v1060
        %v1071 = vunpack.c.h.b16 %v1060
        %v1072 = vunpack.c.l.b16 %v1061
        %v1073 = vunpack.c.h.b16 %v1061
        %v1074 = vpack.c.b16 %v1066, %v1066
        %v1075 = vpack.c.b16 %v1067, %v1067
        %v1076 = vpack.c.b16 %v1068, %v1068
        %v1077 = vpack.c.b16 %v1069, %v1069
        %v1078 = vpack.c.b16 %v1070, %v1070
        %v1079 = vpack.c.b16 %v1071, %v1071
        %v1080 = vpack.c.b16 %v1072, %v1072
        %v1081 = vpack.c.b16 %v1073, %v1073
        %1090 = vst [vmem:[#allocation2 + $0x18] sm:$0xf] %v1074
        %1091 = vst [vmem:[#allocation2 + $0x34] sm:$0xf] %v1075
        %1092 = vst [vmem:[#allocation2 + $0x50] sm:$0xf] %v1076
        %1093 = vst [vmem:[#allocation2 + $0x6c] sm:$0xf] %v1077
        %1094 = vst [vmem:[#allocation2 + $0x88] sm:$0xf] %v1078
        %1095 = vst [vmem:[#allocation2 + $0xa4] sm:$0xf] %v1079
        %1096 = vst [vmem:[#allocation2 + $0xc0] sm:$0xf] %v1080
        %1097 = vst [vmem:[#allocation2 + $0xdc] sm:$0xf] %v1081
        %v1098 = vld [vmem:[%s2] sm:$0xf]
        %v1099 = vld [vmem:[#allocation2] sm:$0xf]
        %v1100 = vld [vmem:[#allocation2 + $0x4] sm:$0xf]
        %v1101 = vld [vmem:[#allocation2 + $0x8] sm:$0xf]
        %v1102 = vld [vmem:[#allocation2 + $0xc] sm:$0xf]
        %v1103 = vld [vmem:[#allocation2 + $0x10] sm:$0xf]
        %v1104 = vld [vmem:[#allocation2 + $0x14] sm:$0xf]
        %v1105 = vld [vmem:[#allocation2 + $0x18] sm:$0xf]
        %v1106 = vld [vmem:[#allocation2 + $0x1c] sm:$0xf]
        %v1107 = vld [vmem:[#allocation2 + $0x20] sm:$0xf]
        %v1108 = vld [vmem:[#allocation2 + $0x24] sm:$0xf]
        %v1109 = vld [vmem:[#allocation2 + $0x28] sm:$0xf]
        %v1110 = vld [vmem:[#allocation2 + $0x2c] sm:$0xf]
        %v1111 = vld [vmem:[#allocation2 + $0x30] sm:$0xf]
        %v1112 = vld [vmem:[#allocation2 + $0x34] sm:$0xf]
        %v1113 = vld [vmem:[#allocation2 + $0x38] sm:$0xf]
        %v1114 = vld [vmem:[#allocation2 + $0x3c] sm:$0xf]
        %v1115 = vld [vmem:[#allocation2 + $0x40] sm:$0xf]
        %v1116 = vld [vmem:[#allocation2 + $0x44] sm:$0xf]
        %v1117 = vld [vmem:[#allocation2 + $0x48] sm:$0xf]
        %v1118 = vld [vmem:[#allocation2 + $0x4c] sm:$0xf]
        %v1119 = vld [vmem:[#allocation2 + $0x50] sm:$0xf]
        %v1120 = vld [vmem:[#allocation2 + $0x54] sm:$0xf]
        %v1121 = vld [vmem:[#allocation2 + $0x58] sm:$0xf]
        %v1122 = vld [vmem:[#allocation2 + $0x5c] sm:$0xf]
        %v1123 = vld [vmem:[#allocation2 + $0x60] sm:$0xf]
        %v1124 = vld [vmem:[#allocation2 + $0x64] sm:$0xf]
        %v1125 = vld [vmem:[#allocation2 + $0x68] sm:$0xf]
        %v1126 = vld [vmem:[#allocation2 + $0x6c] sm:$0xf]
        %v1127 = vld [vmem:[#allocation2 + $0x70] sm:$0xf]
        %v1128 = vld [vmem:[#allocation2 + $0x74] sm:$0xf]
        %v1129 = vld [vmem:[#allocation2 + $0x78] sm:$0xf]
        %v1130 = vld [vmem:[#allocation2 + $0x7c] sm:$0xf]
        %v1131 = vld [vmem:[#allocation2 + $0x80] sm:$0xf]
        %v1132 = vld [vmem:[#allocation2 + $0x84] sm:$0xf]
        %v1133 = vld [vmem:[#allocation2 + $0x88] sm:$0xf]
        %v1134 = vld [vmem:[#allocation2 + $0x8c] sm:$0xf]
        %v1135 = vld [vmem:[#allocation2 + $0x90] sm:$0xf]
        %v1136 = vld [vmem:[#allocation2 + $0x94] sm:$0xf]
        %v1137 = vld [vmem:[#allocation2 + $0x98] sm:$0xf]
        %v1138 = vld [vmem:[#allocation2 + $0x9c] sm:$0xf]
        %v1139 = vld [vmem:[#allocation2 + $0xa0] sm:$0xf]
        %v1140 = vld [vmem:[#allocation2 + $0xa4] sm:$0xf]
        %v1141 = vld [vmem:[#allocation2 + $0xa8] sm:$0xf]
        %v1142 = vld [vmem:[#allocation2 + $0xac] sm:$0xf]
        %v1143 = vld [vmem:[#allocation2 + $0xb0] sm:$0xf]
        %v1144 = vld [vmem:[#allocation2 + $0xb4] sm:$0xf]
        %v1145 = vld [vmem:[#allocation2 + $0xb8] sm:$0xf]
        %v1146 = vld [vmem:[#allocation2 + $0xbc] sm:$0xf]
        %v1147 = vld [vmem:[#allocation2 + $0xc0] sm:$0xf]
        %v1148 = vld [vmem:[#allocation2 + $0xc4] sm:$0xf]
        %v1149 = vld [vmem:[#allocation2 + $0xc8] sm:$0xf]
        %v1150 = vld [vmem:[#allocation2 + $0xcc] sm:$0xf]
        %v1151 = vld [vmem:[#allocation2 + $0xd0] sm:$0xf]
        %v1152 = vld [vmem:[#allocation2 + $0xd4] sm:$0xf]
        %v1153 = vld [vmem:[#allocation2 + $0xd8] sm:$0xf]
        %v1154 = vld [vmem:[#allocation2 + $0xdc] sm:$0xf]
        %v1155 = vld [vmem:[%s3] sm:$0xff]
        %1157 = vset.pattern.permute.xlu0 0
        %1158 = vperm.xlu0 %1157, %v1155
        %v1159 = vpop.permute.xlu0 %1158
        %v1168 = vunpack.c.l.b16 %v1099
        %v1169 = vunpack.c.l.b16 %v1100
        %v1170 = vunpack.c.l.b16 %v1101
        %v1171 = vunpack.c.l.b16 %v1102
        %v1172 = vunpack.c.l.b16 %v1103
        %v1173 = vunpack.c.l.b16 %v1104
        %v1174 = vunpack.c.l.b16 %v1105
        %v1175 = vpack.c.b16 %v1169, %v1168
        %v1176 = vpack.c.b16 %v1171, %v1170
        %v1177 = vpack.c.b16 %v1173, %v1172
        %v1178 = vpack.c.b16 %v1174, %v1174
        %vm1182 = vcmask 457728
        %v1184 = vsel %vm1182, %v1098, 0
        %vm1186 = vcmask 1043456
        %v1188 = vsel %vm1186, %v1178, 0
        %1190 = vmatprep.subr.bf16.mxu0 0
        %1191 = vmatpush1.bf16.msra.mxu0 %v1175
        %1192 = vmatprep.subr.bf16.mxu0 0
        %1193 = vmatpush1.bf16.msra.mxu0 %v1176
        %1194 = vmatprep.subr.bf16.mxu0 0
        %1195 = vmatpush1.bf16.msra.mxu0 %v1177
        %1196 = vmatprep.subr.bf16.mxu0 0
        %1197 = vmatpush1.bf16.msra.mxu0 %v1188
        %1198 = vmatprep.subr.bf16.mxu0 0
        %1199 = vmatpush1.bf16.msra.mxu0 0
        %1200 = vmatprep.subr.bf16.mxu0 0
        %1201 = vmatpush1.bf16.msra.mxu0 0
        %1202 = vmatprep.subr.bf16.mxu0 0
        %1203 = vmatpush1.bf16.msra.mxu0 0
        %1204 = vmatprep.subr.bf16.mxu0 0
        %1205 = vmatpush1.bf16.msra.mxu0 0
        %1206 = vmatprep.subr.bf16.mxu0 0
        %1207 = vmatpush1.bf16.msra.mxu0 0
        %1208 = vmatprep.subr.bf16.mxu0 0
        %1209 = vmatpush1.bf16.msra.mxu0 0
        %1210 = vmatprep.subr.bf16.mxu0 0
        %1211 = vmatpush1.bf16.msra.mxu0 0
        %1212 = vmatprep.subr.bf16.mxu0 0
        %1213 = vmatpush1.bf16.msra.mxu0 0
        %1214 = vmatprep.subr.bf16.mxu0 0
        %1215 = vmatpush1.bf16.msra.mxu0 0
        %1216 = vmatprep.subr.bf16.mxu0 0
        %1217 = vmatpush1.bf16.msra.mxu0 0
        %1218 = vmatprep.subr.bf16.mxu0 0
        %1219 = vmatpush1.bf16.msra.mxu0 0
        %1220 = vmatprep.subr.bf16.mxu0 0
        %1221 = vmatpush1.bf16.msra.mxu0 0
        %1222 = vmatprep.mubr.bf16.mxu0 0
        %1223 = vmatmul.mubr.bf16.gmra.mrb[0].mxu0 %v1184
        %v1224 = vpop.f32.mrb[0].mxu0
        %v1225 = vadd.f32 %v1159, %v1224
        %v1226 = vpop.f32.mrb[0].mxu0
        %v1227 = vpop.f32.mrb[0].mxu0
        %v1228 = vpop.f32.mrb[0].mxu0
        %1229 = vdwg.mxu0
        %v1237 = vunpack.c.l.b16 %v1106
        %v1238 = vunpack.c.l.b16 %v1107
        %v1239 = vunpack.c.l.b16 %v1108
        %v1240 = vunpack.c.l.b16 %v1109
        %v1241 = vunpack.c.l.b16 %v1110
        %v1242 = vunpack.c.l.b16 %v1111
        %v1243 = vunpack.c.l.b16 %v1112
        %v1244 = vpack.c.b16 %v1238, %v1237
        %v1245 = vpack.c.b16 %v1240, %v1239
        %v1246 = vpack.c.b16 %v1242, %v1241
        %v1247 = vpack.c.b16 %v1243, %v1243
        %v1252 = vsel %vm1186, %v1247, 0
        %1254 = vmatprep.subr.bf16.mxu0 0
        %1255 = vmatpush1.bf16.msra.mxu0 %v1244
        %1256 = vmatprep.subr.bf16.mxu0 0
        %1257 = vmatpush1.bf16.msra.mxu0 %v1245
        %1258 = vmatprep.subr.bf16.mxu0 0
        %1259 = vmatpush1.bf16.msra.mxu0 %v1246
        %1260 = vmatprep.subr.bf16.mxu0 0
        %1261 = vmatpush1.bf16.msra.mxu0 %v1252
        %1262 = vmatprep.subr.bf16.mxu0 0
        %1263 = vmatpush1.bf16.msra.mxu0 0
        %1264 = vmatprep.subr.bf16.mxu0 0
        %1265 = vmatpush1.bf16.msra.mxu0 0
        %1266 = vmatprep.subr.bf16.mxu0 0
        %1267 = vmatpush1.bf16.msra.mxu0 0
        %1268 = vmatprep.subr.bf16.mxu0 0
        %1269 = vmatpush1.bf16.msra.mxu0 0
        %1270 = vmatprep.subr.bf16.mxu0 0
        %1271 = vmatpush1.bf16.msra.mxu0 0
        %1272 = vmatprep.subr.bf16.mxu0 0
        %1273 = vmatpush1.bf16.msra.mxu0 0
        %1274 = vmatprep.subr.bf16.mxu0 0
        %1275 = vmatpush1.bf16.msra.mxu0 0
        %1276 = vmatprep.subr.bf16.mxu0 0
        %1277 = vmatpush1.bf16.msra.mxu0 0
        %1278 = vmatprep.subr.bf16.mxu0 0
        %1279 = vmatpush1.bf16.msra.mxu0 0
        %1280 = vmatprep.subr.bf16.mxu0 0
        %1281 = vmatpush1.bf16.msra.mxu0 0
        %1282 = vmatprep.subr.bf16.mxu0 0
        %1283 = vmatpush1.bf16.msra.mxu0 0
        %1284 = vmatprep.subr.bf16.mxu0 0
        %1285 = vmatpush1.bf16.msra.mxu0 0
        %1286 = vmatprep.mubr.bf16.mxu0 0
        %1287 = vmatmul.mubr.bf16.gmra.mrb[0].mxu0 %v1184
        %v1288 = vpop.f32.mrb[0].mxu0
        %v1289 = vadd.f32 %v1159, %v1288
        %v1290 = vpop.f32.mrb[0].mxu0
        %v1291 = vpop.f32.mrb[0].mxu0
        %v1292 = vpop.f32.mrb[0].mxu0
        %1293 = vdwg.mxu0
        %v1301 = vunpack.c.l.b16 %v1113
        %v1302 = vunpack.c.l.b16 %v1114
        %v1303 = vunpack.c.l.b16 %v1115
        %v1304 = vunpack.c.l.b16 %v1116
        %v1305 = vunpack.c.l.b16 %v1117
        %v1306 = vunpack.c.l.b16 %v1118
        %v1307 = vunpack.c.l.b16 %v1119
        %v1308 = vpack.c.b16 %v1302, %v1301
        %v1309 = vpack.c.b16 %v1304, %v1303
        %v1310 = vpack.c.b16 %v1306, %v1305
        %v1311 = vpack.c.b16 %v1307, %v1307
        %v1316 = vsel %vm1186, %v1311, 0
        %1318 = vmatprep.subr.bf16.mxu0 0
        %1319 = vmatpush1.bf16.msra.mxu0 %v1308
        %1320 = vmatprep.subr.bf16.mxu0 0
        %1321 = vmatpush1.bf16.msra.mxu0 %v1309
        %1322 = vmatprep.subr.bf16.mxu0 0
        %1323 = vmatpush1.bf16.msra.mxu0 %v1310
        %1324 = vmatprep.subr.bf16.mxu0 0
        %1325 = vmatpush1.bf16.msra.mxu0 %v1316
        %1326 = vmatprep.subr.bf16.mxu0 0
        %1327 = vmatpush1.bf16.msra.mxu0 0
        %1328 = vmatprep.subr.bf16.mxu0 0
        %1329 = vmatpush1.bf16.msra.mxu0 0
        %1330 = vmatprep.subr.bf16.mxu0 0
        %1331 = vmatpush1.bf16.msra.mxu0 0
        %1332 = vmatprep.subr.bf16.mxu0 0
        %1333 = vmatpush1.bf16.msra.mxu0 0
        %1334 = vmatprep.subr.bf16.mxu0 0
        %1335 = vmatpush1.bf16.msra.mxu0 0
        %1336 = vmatprep.subr.bf16.mxu0 0
        %1337 = vmatpush1.bf16.msra.mxu0 0
        %1338 = vmatprep.subr.bf16.mxu0 0
        %1339 = vmatpush1.bf16.msra.mxu0 0
        %1340 = vmatprep.subr.bf16.mxu0 0
        %1341 = vmatpush1.bf16.msra.mxu0 0
        %1342 = vmatprep.subr.bf16.mxu0 0
        %1343 = vmatpush1.bf16.msra.mxu0 0
        %1344 = vmatprep.subr.bf16.mxu0 0
        %1345 = vmatpush1.bf16.msra.mxu0 0
        %1346 = vmatprep.subr.bf16.mxu0 0
        %1347 = vmatpush1.bf16.msra.mxu0 0
        %1348 = vmatprep.subr.bf16.mxu0 0
        %1349 = vmatpush1.bf16.msra.mxu0 0
        %1350 = vmatprep.mubr.bf16.mxu0 0
        %1351 = vmatmul.mubr.bf16.gmra.mrb[0].mxu0 %v1184
        %v1352 = vpop.f32.mrb[0].mxu0
        %v1353 = vadd.f32 %v1159, %v1352
        %v1354 = vpop.f32.mrb[0].mxu0
        %v1355 = vpop.f32.mrb[0].mxu0
        %v1356 = vpop.f32.mrb[0].mxu0
        %1357 = vdwg.mxu0
        %v1365 = vunpack.c.l.b16 %v1120
        %v1366 = vunpack.c.l.b16 %v1121
        %v1367 = vunpack.c.l.b16 %v1122
        %v1368 = vunpack.c.l.b16 %v1123
        %v1369 = vunpack.c.l.b16 %v1124
        %v1370 = vunpack.c.l.b16 %v1125
        %v1371 = vunpack.c.l.b16 %v1126
        %v1372 = vpack.c.b16 %v1366, %v1365
        %v1373 = vpack.c.b16 %v1368, %v1367
        %v1374 = vpack.c.b16 %v1370, %v1369
        %v1375 = vpack.c.b16 %v1371, %v1371
        %v1380 = vsel %vm1186, %v1375, 0
        %1382 = vmatprep.subr.bf16.mxu0 0
        %1383 = vmatpush1.bf16.msra.mxu0 %v1372
        %1384 = vmatprep.subr.bf16.mxu0 0
        %1385 = vmatpush1.bf16.msra.mxu0 %v1373
        %1386 = vmatprep.subr.bf16.mxu0 0
        %1387 = vmatpush1.bf16.msra.mxu0 %v1374
        %1388 = vmatprep.subr.bf16.mxu0 0
        %1389 = vmatpush1.bf16.msra.mxu0 %v1380
        %1390 = vmatprep.subr.bf16.mxu0 0
        %1391 = vmatpush1.bf16.msra.mxu0 0
        %1392 = vmatprep.subr.bf16.mxu0 0
        %1393 = vmatpush1.bf16.msra.mxu0 0
        %1394 = vmatprep.subr.bf16.mxu0 0
        %1395 = vmatpush1.bf16.msra.mxu0 0
        %1396 = vmatprep.subr.bf16.mxu0 0
        %1397 = vmatpush1.bf16.msra.mxu0 0
        %1398 = vmatprep.subr.bf16.mxu0 0
        %1399 = vmatpush1.bf16.msra.mxu0 0
        %1400 = vmatprep.subr.bf16.mxu0 0
        %1401 = vmatpush1.bf16.msra.mxu0 0
        %1402 = vmatprep.subr.bf16.mxu0 0
        %1403 = vmatpush1.bf16.msra.mxu0 0
        %1404 = vmatprep.subr.bf16.mxu0 0
        %1405 = vmatpush1.bf16.msra.mxu0 0
        %1406 = vmatprep.subr.bf16.mxu0 0
        %1407 = vmatpush1.bf16.msra.mxu0 0
        %1408 = vmatprep.subr.bf16.mxu0 0
        %1409 = vmatpush1.bf16.msra.mxu0 0
        %1410 = vmatprep.subr.bf16.mxu0 0
        %1411 = vmatpush1.bf16.msra.mxu0 0
        %1412 = vmatprep.subr.bf16.mxu0 0
        %1413 = vmatpush1.bf16.msra.mxu0 0
        %1414 = vmatprep.mubr.bf16.mxu0 0
        %1415 = vmatmul.mubr.bf16.gmra.mrb[0].mxu0 %v1184
        %v1416 = vpop.f32.mrb[0].mxu0
        %v1417 = vadd.f32 %v1159, %v1416
        %v1418 = vpop.f32.mrb[0].mxu0
        %v1419 = vpop.f32.mrb[0].mxu0
        %v1420 = vpop.f32.mrb[0].mxu0
        %1421 = vdwg.mxu0
        %v1429 = vunpack.c.l.b16 %v1127
        %v1430 = vunpack.c.l.b16 %v1128
        %v1431 = vunpack.c.l.b16 %v1129
        %v1432 = vunpack.c.l.b16 %v1130
        %v1433 = vunpack.c.l.b16 %v1131
        %v1434 = vunpack.c.l.b16 %v1132
        %v1435 = vunpack.c.l.b16 %v1133
        %v1436 = vpack.c.b16 %v1430, %v1429
        %v1437 = vpack.c.b16 %v1432, %v1431
        %v1438 = vpack.c.b16 %v1434, %v1433
        %v1439 = vpack.c.b16 %v1435, %v1435
        %v1444 = vsel %vm1186, %v1439, 0
        %1446 = vmatprep.subr.bf16.mxu0 0
        %1447 = vmatpush1.bf16.msra.mxu0 %v1436
        %1448 = vmatprep.subr.bf16.mxu0 0
        %1449 = vmatpush1.bf16.msra.mxu0 %v1437
        %1450 = vmatprep.subr.bf16.mxu0 0
        %1451 = vmatpush1.bf16.msra.mxu0 %v1438
        %1452 = vmatprep.subr.bf16.mxu0 0
        %1453 = vmatpush1.bf16.msra.mxu0 %v1444
        %1454 = vmatprep.subr.bf16.mxu0 0
        %1455 = vmatpush1.bf16.msra.mxu0 0
        %1456 = vmatprep.subr.bf16.mxu0 0
        %1457 = vmatpush1.bf16.msra.mxu0 0
        %1458 = vmatprep.subr.bf16.mxu0 0
        %1459 = vmatpush1.bf16.msra.mxu0 0
        %1460 = vmatprep.subr.bf16.mxu0 0
        %1461 = vmatpush1.bf16.msra.mxu0 0
        %1462 = vmatprep.subr.bf16.mxu0 0
        %1463 = vmatpush1.bf16.msra.mxu0 0
        %1464 = vmatprep.subr.bf16.mxu0 0
        %1465 = vmatpush1.bf16.msra.mxu0 0
        %1466 = vmatprep.subr.bf16.mxu0 0
        %1467 = vmatpush1.bf16.msra.mxu0 0
        %1468 = vmatprep.subr.bf16.mxu0 0
        %1469 = vmatpush1.bf16.msra.mxu0 0
        %1470 = vmatprep.subr.bf16.mxu0 0
        %1471 = vmatpush1.bf16.msra.mxu0 0
        %1472 = vmatprep.subr.bf16.mxu0 0
        %1473 = vmatpush1.bf16.msra.mxu0 0
        %1474 = vmatprep.subr.bf16.mxu0 0
        %1475 = vmatpush1.bf16.msra.mxu0 0
        %1476 = vmatprep.subr.bf16.mxu0 0
        %1477 = vmatpush1.bf16.msra.mxu0 0
        %1478 = vmatprep.mubr.bf16.mxu0 0
        %1479 = vmatmul.mubr.bf16.gmra.mrb[0].mxu0 %v1184
        %v1480 = vpop.f32.mrb[0].mxu0
        %v1481 = vadd.f32 %v1159, %v1480
        %v1482 = vpop.f32.mrb[0].mxu0
        %v1483 = vpop.f32.mrb[0].mxu0
        %v1484 = vpop.f32.mrb[0].mxu0
        %1485 = vdwg.mxu0
        %v1493 = vunpack.c.l.b16 %v1134
        %v1494 = vunpack.c.l.b16 %v1135
        %v1495 = vunpack.c.l.b16 %v1136
        %v1496 = vunpack.c.l.b16 %v1137
        %v1497 = vunpack.c.l.b16 %v1138
        %v1498 = vunpack.c.l.b16 %v1139
        %v1499 = vunpack.c.l.b16 %v1140
        %v1500 = vpack.c.b16 %v1494, %v1493
        %v1501 = vpack.c.b16 %v1496, %v1495
        %v1502 = vpack.c.b16 %v1498, %v1497
        %v1503 = vpack.c.b16 %v1499, %v1499
        %v1508 = vsel %vm1186, %v1503, 0
        %1510 = vmatprep.subr.bf16.mxu0 0
        %1511 = vmatpush1.bf16.msra.mxu0 %v1500
        %1512 = vmatprep.subr.bf16.mxu0 0
        %1513 = vmatpush1.bf16.msra.mxu0 %v1501
        %1514 = vmatprep.subr.bf16.mxu0 0
        %1515 = vmatpush1.bf16.msra.mxu0 %v1502
        %1516 = vmatprep.subr.bf16.mxu0 0
        %1517 = vmatpush1.bf16.msra.mxu0 %v1508
        %1518 = vmatprep.subr.bf16.mxu0 0
        %1519 = vmatpush1.bf16.msra.mxu0 0
        %1520 = vmatprep.subr.bf16.mxu0 0
        %1521 = vmatpush1.bf16.msra.mxu0 0
        %1522 = vmatprep.subr.bf16.mxu0 0
        %1523 = vmatpush1.bf16.msra.mxu0 0
        %1524 = vmatprep.subr.bf16.mxu0 0
        %1525 = vmatpush1.bf16.msra.mxu0 0
        %1526 = vmatprep.subr.bf16.mxu0 0
        %1527 = vmatpush1.bf16.msra.mxu0 0
        %1528 = vmatprep.subr.bf16.mxu0 0
        %1529 = vmatpush1.bf16.msra.mxu0 0
        %1530 = vmatprep.subr.bf16.mxu0 0
        %1531 = vmatpush1.bf16.msra.mxu0 0
        %1532 = vmatprep.subr.bf16.mxu0 0
        %1533 = vmatpush1.bf16.msra.mxu0 0
        %1534 = vmatprep.subr.bf16.mxu0 0
        %1535 = vmatpush1.bf16.msra.mxu0 0
        %1536 = vmatprep.subr.bf16.mxu0 0
        %1537 = vmatpush1.bf16.msra.mxu0 0
        %1538 = vmatprep.subr.bf16.mxu0 0
        %1539 = vmatpush1.bf16.msra.mxu0 0
        %1540 = vmatprep.subr.bf16.mxu0 0
        %1541 = vmatpush1.bf16.msra.mxu0 0
        %1542 = vmatprep.mubr.bf16.mxu0 0
        %1543 = vmatmul.mubr.bf16.gmra.mrb[0].mxu0 %v1184
        %v1544 = vpop.f32.mrb[0].mxu0
        %v1545 = vadd.f32 %v1159, %v1544
        %v1546 = vpop.f32.mrb[0].mxu0
        %v1547 = vpop.f32.mrb[0].mxu0
        %v1548 = vpop.f32.mrb[0].mxu0
        %1549 = vdwg.mxu0
        %v1557 = vunpack.c.l.b16 %v1141
        %v1558 = vunpack.c.l.b16 %v1142
        %v1559 = vunpack.c.l.b16 %v1143
        %v1560 = vunpack.c.l.b16 %v1144
        %v1561 = vunpack.c.l.b16 %v1145
        %v1562 = vunpack.c.l.b16 %v1146
        %v1563 = vunpack.c.l.b16 %v1147
        %v1564 = vpack.c.b16 %v1558, %v1557
        %v1565 = vpack.c.b16 %v1560, %v1559
        %v1566 = vpack.c.b16 %v1562, %v1561
        %v1567 = vpack.c.b16 %v1563, %v1563
        %v1572 = vsel %vm1186, %v1567, 0
        %1574 = vmatprep.subr.bf16.mxu0 0
        %1575 = vmatpush1.bf16.msra.mxu0 %v1564
        %1576 = vmatprep.subr.bf16.mxu0 0
        %1577 = vmatpush1.bf16.msra.mxu0 %v1565
        %1578 = vmatprep.subr.bf16.mxu0 0
        %1579 = vmatpush1.bf16.msra.mxu0 %v1566
        %1580 = vmatprep.subr.bf16.mxu0 0
        %1581 = vmatpush1.bf16.msra.mxu0 %v1572
        %1582 = vmatprep.subr.bf16.mxu0 0
        %1583 = vmatpush1.bf16.msra.mxu0 0
        %1584 = vmatprep.subr.bf16.mxu0 0
        %1585 = vmatpush1.bf16.msra.mxu0 0
        %1586 = vmatprep.subr.bf16.mxu0 0
        %1587 = vmatpush1.bf16.msra.mxu0 0
        %1588 = vmatprep.subr.bf16.mxu0 0
        %1589 = vmatpush1.bf16.msra.mxu0 0
        %1590 = vmatprep.subr.bf16.mxu0 0
        %1591 = vmatpush1.bf16.msra.mxu0 0
        %1592 = vmatprep.subr.bf16.mxu0 0
        %1593 = vmatpush1.bf16.msra.mxu0 0
        %1594 = vmatprep.subr.bf16.mxu0 0
        %1595 = vmatpush1.bf16.msra.mxu0 0
        %1596 = vmatprep.subr.bf16.mxu0 0
        %1597 = vmatpush1.bf16.msra.mxu0 0
        %1598 = vmatprep.subr.bf16.mxu0 0
        %1599 = vmatpush1.bf16.msra.mxu0 0
        %1600 = vmatprep.subr.bf16.mxu0 0
        %1601 = vmatpush1.bf16.msra.mxu0 0
        %1602 = vmatprep.subr.bf16.mxu0 0
        %1603 = vmatpush1.bf16.msra.mxu0 0
        %1604 = vmatprep.subr.bf16.mxu0 0
        %1605 = vmatpush1.bf16.msra.mxu0 0
        %1606 = vmatprep.mubr.bf16.mxu0 0
        %1607 = vmatmul.mubr.bf16.gmra.mrb[0].mxu0 %v1184
        %v1608 = vpop.f32.mrb[0].mxu0
        %v1609 = vadd.f32 %v1159, %v1608
        %v1610 = vpop.f32.mrb[0].mxu0
        %v1611 = vpop.f32.mrb[0].mxu0
        %v1612 = vpop.f32.mrb[0].mxu0
        %1613 = vdwg.mxu0
        %v1621 = vunpack.c.l.b16 %v1148
        %v1622 = vunpack.c.l.b16 %v1149
        %v1623 = vunpack.c.l.b16 %v1150
        %v1624 = vunpack.c.l.b16 %v1151
        %v1625 = vunpack.c.l.b16 %v1152
        %v1626 = vunpack.c.l.b16 %v1153
        %v1627 = vunpack.c.l.b16 %v1154
        %v1628 = vpack.c.b16 %v1622, %v1621
        %v1629 = vpack.c.b16 %v1624, %v1623
        %v1630 = vpack.c.b16 %v1626, %v1625
        %v1631 = vpack.c.b16 %v1627, %v1627
        %v1636 = vsel %vm1186, %v1631, 0
        %1638 = vmatprep.subr.bf16.mxu0 0
        %1639 = vmatpush1.bf16.msra.mxu0 %v1628
        %1640 = vmatprep.subr.bf16.mxu0 0
        %1641 = vmatpush1.bf16.msra.mxu0 %v1629
        %1642 = vmatprep.subr.bf16.mxu0 0
        %1643 = vmatpush1.bf16.msra.mxu0 %v1630
        %1644 = vmatprep.subr.bf16.mxu0 0
        %1645 = vmatpush1.bf16.msra.mxu0 %v1636
        %1646 = vmatprep.subr.bf16.mxu0 0
        %1647 = vmatpush1.bf16.msra.mxu0 0
        %1648 = vmatprep.subr.bf16.mxu0 0
        %1649 = vmatpush1.bf16.msra.mxu0 0
        %1650 = vmatprep.subr.bf16.mxu0 0
        %1651 = vmatpush1.bf16.msra.mxu0 0
        %1652 = vmatprep.subr.bf16.mxu0 0
        %1653 = vmatpush1.bf16.msra.mxu0 0
        %1654 = vmatprep.subr.bf16.mxu0 0
        %1655 = vmatpush1.bf16.msra.mxu0 0
        %1656 = vmatprep.subr.bf16.mxu0 0
        %1657 = vmatpush1.bf16.msra.mxu0 0
        %1658 = vmatprep.subr.bf16.mxu0 0
        %1659 = vmatpush1.bf16.msra.mxu0 0
        %1660 = vmatprep.subr.bf16.mxu0 0
        %1661 = vmatpush1.bf16.msra.mxu0 0
        %1662 = vmatprep.subr.bf16.mxu0 0
        %1663 = vmatpush1.bf16.msra.mxu0 0
        %1664 = vmatprep.subr.bf16.mxu0 0
        %1665 = vmatpush1.bf16.msra.mxu0 0
        %1666 = vmatprep.subr.bf16.mxu0 0
        %1667 = vmatpush1.bf16.msra.mxu0 0
        %1668 = vmatprep.subr.bf16.mxu0 0
        %1669 = vmatpush1.bf16.msra.mxu0 0
        %1670 = vmatprep.mubr.bf16.mxu0 0
        %1671 = vmatmul.mubr.bf16.gmra.mrb[0].mxu0 %v1184
        %v1672 = vpop.f32.mrb[0].mxu0
        %v1673 = vadd.f32 %v1159, %v1672
        %v1674 = vpop.f32.mrb[0].mxu0
        %v1675 = vpop.f32.mrb[0].mxu0
        %v1676 = vpop.f32.mrb[0].mxu0
        %1677 = vdwg.mxu0
        %1678 = vst [vmem:[%s230] sm:$0xff] %v1225
        %1679 = vst [vmem:[%s230 + $0x8] sm:$0xff] %v1289
        %1680 = vst [vmem:[%s230 + $0x10] sm:$0xff] %v1353
        %1681 = vst [vmem:[%s230 + $0x18] sm:$0xff] %v1417
        %1682 = vst [vmem:[%s230 + $0x20] sm:$0xff] %v1481
        %1683 = vst [vmem:[%s230 + $0x28] sm:$0xff] %v1545
        %1684 = vst [vmem:[%s230 + $0x30] sm:$0xff] %v1609
        %1685 = vst [vmem:[%s230 + $0x38] sm:$0xff] %v1673
        %s1686 = sand.u32 %s119, 1
        %s1687 = scalar_lea.sflag [#allocation5], %s1686
        %s1688 = sand.u32 %s119, 1
        %s1689 = smul.addr %s1688, 64
        %s1690 = scalar_lea.vmem [#allocation8], %s1689
        // Predicated region
        $region45: #{tpu_custom_call.1} parent=35 // pred_check
          %p1691 = pneg %p129
        $region46: #{tpu_custom_call.1} parent=35 // pred_check_branch
          %1693 = sbr.rel (%p1691) target = $region48
        $region47: #{tpu_custom_call.1} parent=35 // pred_region
          %s1694 = smul.u32 8, %s22
          %s1696 = ssub.s32 1024, 1024
          %1697 = vsyncadd %s1687, %s1696
          %s1698 = smul.addr %s1694, 128
          %s1699 = scalar_lea.hbm %s4, %s1698
          %s1700 = sshll.u32 %s1690, 4
          %s1701 = int_to_ptr.vmem [resolvable:$true] %s1700
          %1706 = dma.vmem_to_hbm [thread:$0]  %s1701, 1024, %s1699, %s1687, 128, 128, 8
        $region48: #{tpu_custom_call.1} parent=35 // pred_fallthru
          _
      $region36: #{tpu_custom_call.1} parent=5 // pred_fallthru
        _
      %p1707 = scmp.le.s32.totalorder 2, %s17
      // Predicated region
      $region49: #{tpu_custom_call.1} parent=5 // pred_check
        %p1708 = pneg %p1707
      $region50: #{tpu_custom_call.1} parent=5 // pred_check_branch
        %1710 = sbr.rel (%p1708) target = $region52
      $region51: #{tpu_custom_call.1} parent=5 // pred_region
        %s1711 = ssub.s32 %s17, 2
        // Predicated region
        $region53: #{tpu_custom_call.1} parent=51 // pred_check
          %p1712 = pneg %p135
        $region54: #{tpu_custom_call.1} parent=51 // pred_check_branch
          %1714 = sbr.rel (%p1712) target = $region56
        $region55: #{tpu_custom_call.1} parent=51 // pred_region
          %s1715 = sand.u32 %s120, 1
          %s1716 = scalar_lea.sflag [#allocation5], %s1715
          %s1717 = sand.u32 %s120, 1
          %s1718 = smul.addr %s1717, 64
          %s1719 = scalar_lea.vmem [#allocation8], %s1718
          %1720 = dma.done %s1716, 1024
        $region56: #{tpu_custom_call.1} parent=51 // pred_fallthru
          _
      $region52: #{tpu_custom_call.1} parent=5 // pred_fallthru
        _
    $region6: #{tpu_custom_call.1} parent=1 // loop_footer
      %s21 = sadd.s32 1, %s17
    $region7: #{tpu_custom_call.1} parent=1 // loop_footer_branch
      %16 = sbr.rel target = $region3
    $region8: #{tpu_custom_call.1} parent=1 // loop_exit
      _
    %1721 = vsyncpa [#allocation4], 1
    %s1722 = scalar_lea.sflag [#allocation4], 1
    %1723 = vsyncpa %s1722, 1
    %1724 = vsyncpa [#allocation7], 1
    %s1725 = scalar_lea.sflag [#allocation7], 1
    %1726 = vsyncpa %s1725, 1
    %1727 = vsyncpa [#allocation5], 1
    %s1728 = scalar_lea.sflag [#allocation5], 1
    %1729 = vsyncpa %s1728, 1

</llo_original>
